<compile_context>
chip_gen: v7x
topology: tpu7x:2x2x1
jax: 0.10.0
libtpu: 0.0.40
codegen_flags: <defaults>
</compile_context>

<pallas_src>
import functools

import jax
import jax.numpy as jnp
from jax.experimental import pallas as pl
from jax.experimental.pallas import tpu as pltpu


def _round_up(x, m):
    return ((x + m - 1) // m) * m


def _pick_tm(M, K, N, itemsize, budget_bytes=8 << 20):
    """Largest multiple-of-8 divisor of M (<=1024) whose double-buffered
    (tm,K) x-tile + (tm,N) out-tile fit in `budget_bytes`."""
    max_rows = max(8, budget_bytes // (2 * (K + N) * itemsize))
    cap = min(M, 1024, max_rows)
    best = 8
    cand = 8
    while cand <= cap:
        if M % cand == 0:
            best = cand
        cand += 8
    return best


# --------------------- Pallas kernel 1: input projection -------------------- #
def _input_proj_kernel(x_ref, w_ref, b_ref, o_ref):
    # o = x @ W + b ; operands may be bf16, accumulation is f32, bias is f32.
    acc = jnp.dot(x_ref[...], w_ref[...], preferred_element_type=jnp.float32)
    o_ref[...] = (acc + b_ref[...]).astype(o_ref.dtype)


def input_proj_pallas(x2, w, b, *, out_dtype, tm, tn, vmem_limit_bytes=None):
    """x2: (M, K) padded, w: (K, N) padded, b: (1, N) f32. Returns (M, N)."""
    M, K = x2.shape
    N = w.shape[1]
    grid = (M // tm, N // tn)
    cost = pl.CostEstimate(
        flops=int(2 * M * K * N),
        transcendentals=0,
        bytes_accessed=int(M * K * x2.dtype.itemsize + K * N * w.dtype.itemsize
                           + N * 4 + M * N * jnp.dtype(out_dtype).itemsize),
    )
    return pl.pallas_call(
        _input_proj_kernel,
        out_shape=jax.ShapeDtypeStruct((M, N), out_dtype),
        grid_spec=pltpu.PrefetchScalarGridSpec(
            num_scalar_prefetch=0,
            grid=grid,
            in_specs=[
                pl.BlockSpec((tm, K), lambda m, n: (m, 0)),
                pl.BlockSpec((K, tn), lambda m, n: (0, n)),
                pl.BlockSpec((1, tn), lambda m, n: (0, n)),
            ],
            out_specs=pl.BlockSpec((tm, tn), lambda m, n: (m, n)),
        ),
        compiler_params=pltpu.CompilerParams(
            dimension_semantics=("parallel", "parallel"),
            vmem_limit_bytes=vmem_limit_bytes),
        cost_estimate=cost,
    )(x2, w, b)


# ---------------------- Pallas kernel 2: GRU recurrence --------------------- #
def _gru_recurrence_kernel(gi_ref, h0_ref, whh_ref, bhn_ref, out_ref, h_scratch,
                           *, true_t, unroll):
    """One chunk of Tc time steps per (sequential) grid iteration.

    gi_ref  : (Tc, Bp, 3*Hp)  precomputed x@Wih_cat + folded biases (act dtype)
    h0_ref  : (Bp, Hp) f32    initial hidden state (padded)
    whh_ref : (Hp, 3*Hp)      fused hidden->hidden weights, gate order (r, z, n)
    bhn_ref : (1, Hp) f32     b_hn (must stay inside the step: r*(gh_n + b_hn))
    out_ref : (Tc, Bp, Hp)    per-step hidden states (act dtype)
    h_scratch: VMEM (Bp, Hp) f32 carry, persists across grid iterations
    """
    c = pl.program_id(0)
    Tc, Bp, Hp = out_ref.shape

    @pl.when(c == 0)
    def _():
        h_scratch[...] = h0_ref[...].astype(jnp.float32)

    whh = whh_ref[...]                                               # resident weights
    bhn = jnp.broadcast_to(bhn_ref[...].astype(jnp.float32), (Bp, Hp))  # hoisted

    needs_guard = (true_t % Tc) != 0   # trace-time: only emit guards if padding exists

    if needs_guard:
        # Zero-fill the (single) partial chunk so downstream layers read defined data;
        # valid rows are overwritten by the loop below.
        @pl.when((c + 1) * Tc > true_t)
        def _():
            out_ref[...] = jnp.zeros_like(out_ref)

    def do_step(t, h):
        gi = gi_ref[t]                                                # (Bp, 3Hp)
        gh = jnp.dot(h.astype(whh.dtype), whh,
                     preferred_element_type=jnp.float32)              # single fused matmul
        rz = jax.nn.sigmoid(gi[:, :2 * Hp] + gh[:, :2 * Hp])          # one fused EUP slab
        r = rz[:, :Hp]
        z = rz[:, Hp:]
        n = jnp.tanh(gi[:, 2 * Hp:] + r * (gh[:, 2 * Hp:] + bhn))
        h_new = n + z * (h - n)                                       # == (1-z)*n + z*h
        out_ref[t] = h_new.astype(out_ref.dtype)
        return h_new

    if needs_guard:
        def step(t, h):
            return jax.lax.cond(c * Tc + t < true_t, do_step, lambda _t, hh: hh, t, h)
    else:
        step = do_step

    h_final = jax.lax.fori_loop(0, Tc, step, h_scratch[...], unroll=unroll)
    h_scratch[...] = h_final


def gru_recurrence_pallas(gi, h0, whh, bhn, *, tc, true_t, out_dtype,
                          unroll=8, vmem_limit_bytes=None):
    """gi: (Tp, Bp, 3Hp), h0: (Bp, Hp) f32. Returns hidden states (Tp, Bp, Hp)."""
    Tp, Bp, Gp = gi.shape
    Hp = h0.shape[-1]
    grid = (Tp // tc,)
    cost = pl.CostEstimate(
        flops=int(2 * true_t * Bp * Hp * Gp),
        transcendentals=int(true_t * Bp * Gp),
        bytes_accessed=int(gi.size * gi.dtype.itemsize
                           + Tp * Bp * Hp * jnp.dtype(out_dtype).itemsize
                           + whh.size * whh.dtype.itemsize + h0.size * 4),
    )
    kernel = functools.partial(_gru_recurrence_kernel, true_t=true_t,
                               unroll=min(unroll, tc))
    return pl.pallas_call(
        kernel,
        out_shape=jax.ShapeDtypeStruct((Tp, Bp, Hp), out_dtype),
        grid_spec=pltpu.PrefetchScalarGridSpec(
            num_scalar_prefetch=0,
            grid=grid,
            in_specs=[
                pl.BlockSpec((tc, Bp, Gp), lambda c: (c, 0, 0)),
                pl.BlockSpec((Bp, Hp), lambda c: (0, 0)),
                pl.BlockSpec((Hp, Gp), lambda c: (0, 0)),
                pl.BlockSpec((1, Hp), lambda c: (0, 0)),
            ],
            out_specs=pl.BlockSpec((tc, Bp, Hp), lambda c: (c, 0, 0)),
            scratch_shapes=[pltpu.VMEM((Bp, Hp), jnp.float32)],
        ),
        compiler_params=pltpu.CompilerParams(
            dimension_semantics=("arbitrary",),   # time chunks are strictly sequential
            vmem_limit_bytes=vmem_limit_bytes),
        cost_estimate=cost,
    )(gi, h0, whh, bhn)


# ------------------------------ Parameters --------------------------------- #
def init_gru_params(key, input_size, hidden_size, num_layers):
    """Raw params matching nn.GRU shapes, gate order (r, z, n)."""
    params = []
    bound = 1.0 / (hidden_size ** 0.5)
    for layer in range(num_layers):
        in_l = input_size if layer == 0 else hidden_size
        key, k1, k2, k3, k4 = jax.random.split(key, 5)
        params.append(dict(
            w_ih=jax.random.uniform(k1, (3, hidden_size, in_l), jnp.float32, -bound, bound),
            w_hh=jax.random.uniform(k2, (3, hidden_size, hidden_size), jnp.float32, -bound, bound),
            b_ih=jax.random.uniform(k3, (3, hidden_size), jnp.float32, -bound, bound),
            b_hh=jax.random.uniform(k4, (3, hidden_size), jnp.float32, -bound, bound),
        ))
    return params


def prepare_kernel_params(raw_params, input_size, hidden_size, param_dtype=jnp.bfloat16):
    """Fuse gates, fold biases, pad to lane/sublane-friendly shapes.

    wih : (Din_p, 3*Hp) param_dtype   whh : (Hp, 3*Hp) param_dtype
    bcat: (1, 3*Hp) f32  (r/z slots: b_ih+b_hh, n slot: b_ih only)
    bhn : (1, Hp)   f32  (b_hh for the n gate; stays inside the step)
    """
    H = hidden_size
    Hp = _round_up(H, 128)
    Gp = 3 * Hp
    prepped = []
    for layer, p in enumerate(raw_params):
        in_l = input_size if layer == 0 else hidden_size
        Din_p = _round_up(in_l, 128) if layer == 0 else Hp
        w_ih, w_hh, b_ih, b_hh = p["w_ih"], p["w_hh"], p["b_ih"], p["b_hh"]

        wih_p = jnp.zeros((Din_p, Gp), jnp.float32)
        whh_p = jnp.zeros((Hp, Gp), jnp.float32)
        bcat = jnp.zeros((1, Gp), jnp.float32)
        for g in range(3):
            wih_p = wih_p.at[:in_l, g * Hp:g * Hp + H].set(w_ih[g].T)
            whh_p = whh_p.at[:H, g * Hp:g * Hp + H].set(w_hh[g].T)
        bcat = bcat.at[0, 0 * Hp:0 * Hp + H].set(b_ih[0] + b_hh[0])   # r
        bcat = bcat.at[0, 1 * Hp:1 * Hp + H].set(b_ih[1] + b_hh[1])   # z
        bcat = bcat.at[0, 2 * Hp:2 * Hp + H].set(b_ih[2])             # n (input part)
        bhn = jnp.zeros((1, Hp), jnp.float32).at[0, :H].set(b_hh[2])

        prepped.append(dict(
            wih=wih_p.astype(param_dtype),
            whh=whh_p.astype(param_dtype),
            bcat=bcat,      # biases stay f32 (added to f32 accumulators)
            bhn=bhn,
        ))
    return prepped


# ------------------------------ Forward pass -------------------------------- #
@jax.jit
def gru_networks_forward(kernel_params, inp, hidden_state):
    """Matches GRUNetworks.forward(inp, hidden_state), batch_first=True.

    inp: (B, T, input_size), hidden_state: (num_layers, B, H)
    returns (output: (B, T, H) f32, h_n: (num_layers, B, H) f32)
    """
    B, T, I = inp.shape
    H = hidden_state.shape[-1]
    Hp = kernel_params[0]["whh"].shape[0]
    Gp = 3 * Hp
    act_dtype = kernel_params[0]["whh"].dtype   # bf16 fast path / f32 exact path
    act_bytes = jnp.dtype(act_dtype).itemsize

    Bp = _round_up(B, 8)
    # Time chunk: large enough to amortize per-grid-step overhead, small enough that
    # the double-buffered gi chunk stays well inside scoped VMEM on every generation.
    tc_cap = max(1, (8 << 20) // (2 * Bp * Gp * act_bytes))
    Tc = max(1, min(T, 128, tc_cap))
    Tp = _round_up(T, Tc)                 # padded steps are skipped inside the kernel
    Ip = _round_up(I, 128)

    # time-major, padded, act dtype: (Tp, Bp, Ip)
    x = jnp.transpose(inp, (1, 0, 2)).astype(act_dtype)
    x = jnp.pad(x, ((0, Tp - T), (0, Bp - B), (0, Ip - I)))

    h_finals = []
    out_p = x
    for layer, p in enumerate(kernel_params):
        h0 = jnp.pad(hidden_state[layer].astype(jnp.float32),
                     ((0, Bp - B), (0, Hp - H)))
        din = x.shape[-1]
        M = Tp * Bp
        tm = _pick_tm(M, din, Gp, act_bytes)          # decoupled from Tc*Bp
        tn = Gp if Gp <= 1536 else Hp                 # N-tiling only for large H
        # Hoisted, fused input projection: one big MXU matmul off the serial path.
        gi = input_proj_pallas(x.reshape(M, din), p["wih"], p["bcat"],
                               out_dtype=act_dtype, tm=tm, tn=tn)
        gi = gi.reshape(Tp, Bp, Gp)
        # Serial recurrence: one fused h @ Whh_cat per real step (padded steps skipped).
        out_p = gru_recurrence_pallas(gi, h0, p["whh"], p["bhn"],
                                      tc=Tc, true_t=T, out_dtype=act_dtype)
        h_finals.append(out_p[T - 1, :B, :H].astype(jnp.float32))
        x = out_p                                      # padded output feeds next layer

    output = jnp.transpose(out_p[:T, :B, :H], (1, 0, 2)).astype(jnp.float32)
    h_n = jnp.stack(h_finals, axis=0)
    return output, h_n


# --------------------- Pure-JAX reference (lax.scan, true f32) --------------- #
def gru_networks_reference(raw_params, inp, hidden_state):
    x = jnp.transpose(inp, (1, 0, 2))  # (T, B, I)
    h_finals = []
    hp = jax.lax.Precision.HIGHEST
    for layer, p in enumerate(raw_params):
        w_ih, w_hh, b_ih, b_hh = p["w_ih"], p["w_hh"], p["b_ih"], p["b_hh"]

        def step(h, x_t):
            gi = jnp.einsum('bi,ghi->gbh', x_t, w_ih, precision=hp) + b_ih[:, None, :]
            gh = jnp.einsum('bh,gkh->gbk', h, w_hh, precision=hp) + b_hh[:, None, :]
            r = jax.nn.sigmoid(gi[0] + gh[0])
            z = jax.nn.sigmoid(gi[1] + gh[1])
            n = jnp.tanh(gi[2] + r * gh[2])
            h_new = (1.0 - z) * n + z * h
            return h_new, h_new

        h_fin, outs = jax.lax.scan(step, hidden_state[layer], x)
        x = outs
        h_finals.append(h_fin)
    return jnp.transpose(x, (1, 0, 2)), jnp.stack(h_finals, axis=0)


if __name__ == "__main__":
    batch, seq, input_size, hidden_size, num_layers = 2, 8, 16, 32, 2

    key = jax.random.PRNGKey(0)
    kp, kx, kh = jax.random.split(key, 3)

    raw_params = init_gru_params(kp, input_size, hidden_size, num_layers)
    inp = jax.random.normal(kx, (batch, seq, input_size), jnp.float32)
    hidden_state = jax.random.normal(kh, (num_layers, batch, hidden_size), jnp.float32)

    out_ref, h_n_ref = gru_networks_reference(raw_params, inp, hidden_state)

    # f32 parameter path (sanity check against the f32 reference).
    params_f32 = prepare_kernel_params(raw_params, input_size, hidden_size,
                                       param_dtype=jnp.float32)
    out32, hn32 = jax.block_until_ready(
        gru_networks_forward(params_f32, inp, hidden_state))
    assert out32.shape == (batch, seq, hidden_size)
    assert hn32.shape == (num_layers, batch, hidden_size)
    assert jnp.allclose(out32, out_ref, atol=2e-2, rtol=2e-2), "f32 output mismatch"
    assert jnp.allclose(hn32, h_n_ref, atol=2e-2, rtol=2e-2), "f32 h_n mismatch"

    # bf16 fast path (MXU-native operands, f32 accumulation) — relaxed tolerance
    # as flagged in the review (bf16 operands cannot hit 1e-5 vs an f32 reference).
    params_bf16 = prepare_kernel_params(raw_params, input_size, hidden_size,
                                        param_dtype=jnp.bfloat16)
    out16, hn16 = jax.block_until_ready(
        gru_networks_forward(params_bf16, inp, hidden_state))
    assert out16.shape == (batch, seq, hidden_size)
    assert hn16.shape == (num_layers, batch, hidden_size)
    assert jnp.allclose(out16, out_ref, atol=5e-2, rtol=5e-2), "bf16 output mismatch"
    assert jnp.allclose(hn16, h_n_ref, atol=5e-2, rtol=5e-2), "bf16 h_n mismatch"

    print("KERNEL_OK")
</pallas_src>

<mosaic_0001>
module attributes {stable_mosaic.version = 11 : i64} {
  func.func @_gru_recurrence_kernel(%arg0: i32, %arg1: memref<8x8x384xf32, #tpu.memory_space<vmem>>, %arg2: memref<8x128xf32, #tpu.memory_space<vmem>>, %arg3: memref<128x384xf32, #tpu.memory_space<vmem>>, %arg4: memref<1x128xf32, #tpu.memory_space<vmem>>, %arg5: memref<8x8x128xf32, #tpu.memory_space<vmem>>, %arg6: memref<8x128xf32, #tpu.memory_space<vmem>>) attributes {dimension_semantics = [#tpu.dimension_semantics<arbitrary>], iteration_bounds = array<i64: 1>, scalar_prefetch = 0 : i64, scratch_operands = 1 : i64, tpu.core_type = #tpu.core_type<tc>, window_params = [{transform_indices = @transform_0, window_bounds = array<i64: 8, 8, 384>}, {pipeline_mode = #tpu.pipeline_mode<synchronous>, transform_indices = @transform_1, window_bounds = array<i64: 8, 128>}, {pipeline_mode = #tpu.pipeline_mode<synchronous>, transform_indices = @transform_2, window_bounds = array<i64: 128, 384>}, {pipeline_mode = #tpu.pipeline_mode<synchronous>, transform_indices = @transform_3, window_bounds = array<i64: 1, 128>}, {transform_indices = @transform_4, window_bounds = array<i64: 8, 8, 128>}]} {
    %c0_i32 = arith.constant 0 : i32
    %0 = arith.cmpi eq, %arg0, %c0_i32 : i32
    %1 = arith.extui %0 : i1 to i32
    %c0_i32_0 = arith.constant 0 : i32
    %2 = arith.cmpi ne, %1, %c0_i32_0 : i32
    scf.if %2 {
      %c0_56 = arith.constant 0 : index
      %c0_57 = arith.constant 0 : index
      %225 = vector.load %arg2[%c0_56, %c0_57] : memref<8x128xf32, #tpu.memory_space<vmem>>, vector<8x128xf32>
      %c0_58 = arith.constant 0 : index
      %c0_59 = arith.constant 0 : index
      %226 = vector.load %arg6[%c0_58, %c0_59] : memref<8x128xf32, #tpu.memory_space<vmem>>, vector<8x128xf32>
      tpu.vector_store %arg6[%c0_58, %c0_59], %225 {strides = array<i32>} : memref<8x128xf32, #tpu.memory_space<vmem>>, vector<8x128xf32>,
    } else {
    }
    %c0 = arith.constant 0 : index
    %c0_1 = arith.constant 0 : index
    %3 = vector.load %arg3[%c0, %c0_1] : memref<128x384xf32, #tpu.memory_space<vmem>>, vector<128x384xf32>
    %c0_2 = arith.constant 0 : index
    %c0_3 = arith.constant 0 : index
    %4 = vector.load %arg4[%c0_2, %c0_3] : memref<1x128xf32, #tpu.memory_space<vmem>>, vector<1x128xf32>
    %5 = vector.shape_cast %4 : vector<1x128xf32> to vector<1x128xf32>
    %6 = vector.broadcast %5 : vector<1x128xf32> to vector<8x128xf32>
    %c0_4 = arith.constant 0 : index
    %c0_5 = arith.constant 0 : index
    %7 = vector.load %arg6[%c0_4, %c0_5] : memref<8x128xf32, #tpu.memory_space<vmem>>, vector<8x128xf32>
    %c0_i32_6 = arith.constant 0 : i32
    %8 = arith.index_cast %c0_i32_6 : i32 to index
    %c0_7 = arith.constant 0 : index
    %c0_8 = arith.constant 0 : index
    %9 = vector.load %arg1[%8, %c0_7, %c0_8] : memref<8x8x384xf32, #tpu.memory_space<vmem>>, vector<1x8x384xf32>
    %10 = vector.shape_cast %9 : vector<1x8x384xf32> to vector<8x384xf32>
    %cst = arith.constant dense<0.000000e+00> : vector<8x384xf32>
    %11 = tpu.matmul %7, %3, %cst {dimension_numbers = #tpu.dot_dimension_numbers<[1], [0], [0], [1], [0, 0, 1, 1], [], []>} : vector<8x128xf32>, vector<128x384xf32>, vector<8x384xf32> -> vector<8x384xf32>
    %12 = vector.extract_strided_slice %10 {offsets = [0, 0], sizes = [8, 256], strides = [1, 1]} : vector<8x384xf32> to vector<8x256xf32>
    %13 = vector.extract_strided_slice %11 {offsets = [0, 0], sizes = [8, 256], strides = [1, 1]} : vector<8x384xf32> to vector<8x256xf32>
    %14 = arith.addf %12, %13 : vector<8x256xf32>
    %15 = arith.negf %14 : vector<8x256xf32>
    %16 = math.exp %15 : vector<8x256xf32>
    %cst_9 = arith.constant 1.000000e+00 : f32
    %17 = vector.broadcast %cst_9 : f32 to vector<8x256xf32>
    %18 = arith.addf %17, %16 : vector<8x256xf32>
    %19 = arith.divf %17, %18 : vector<8x256xf32>
    %20 = vector.extract_strided_slice %19 {offsets = [0, 0], sizes = [8, 128], strides = [1, 1]} : vector<8x256xf32> to vector<8x128xf32>
    %21 = vector.extract_strided_slice %19 {offsets = [0, 128], sizes = [8, 128], strides = [1, 1]} : vector<8x256xf32> to vector<8x128xf32>
    %22 = vector.extract_strided_slice %10 {offsets = [0, 256], sizes = [8, 128], strides = [1, 1]} : vector<8x384xf32> to vector<8x128xf32>
    %23 = vector.extract_strided_slice %11 {offsets = [0, 256], sizes = [8, 128], strides = [1, 1]} : vector<8x384xf32> to vector<8x128xf32>
    %24 = arith.addf %23, %6 : vector<8x128xf32>
    %25 = arith.mulf %20, %24 : vector<8x128xf32>
    %26 = arith.addf %22, %25 : vector<8x128xf32>
    %27 = math.tanh %26 : vector<8x128xf32>
    %28 = arith.subf %7, %27 : vector<8x128xf32>
    %29 = arith.mulf %21, %28 : vector<8x128xf32>
    %30 = arith.addf %27, %29 : vector<8x128xf32>
    %31 = arith.index_cast %c0_i32_6 : i32 to index
    %c0_10 = arith.constant 0 : index
    %c0_11 = arith.constant 0 : index
    %32 = vector.load %arg5[%31, %c0_10, %c0_11] : memref<8x8x128xf32, #tpu.memory_space<vmem>>, vector<1x8x128xf32>
    %33 = vector.shape_cast %32 : vector<1x8x128xf32> to vector<8x128xf32>
    %34 = vector.shape_cast %30 : vector<8x128xf32> to vector<1x8x128xf32>
    tpu.vector_store %arg5[%31, %c0_10, %c0_11], %34 {strides = array<i32>} : memref<8x8x128xf32, #tpu.memory_space<vmem>>, vector<1x8x128xf32>,
    %c1_i32 = arith.constant 1 : i32
    %35 = arith.index_cast %c1_i32 : i32 to index
    %c0_12 = arith.constant 0 : index
    %c0_13 = arith.constant 0 : index
    %36 = vector.load %arg1[%35, %c0_12, %c0_13] : memref<8x8x384xf32, #tpu.memory_space<vmem>>, vector<1x8x384xf32>
    %37 = vector.shape_cast %36 : vector<1x8x384xf32> to vector<8x384xf32>
    %cst_14 = arith.constant dense<0.000000e+00> : vector<8x384xf32>
    %38 = tpu.matmul %30, %3, %cst_14 {dimension_numbers = #tpu.dot_dimension_numbers<[1], [0], [0], [1], [0, 0, 1, 1], [], []>} : vector<8x128xf32>, vector<128x384xf32>, vector<8x384xf32> -> vector<8x384xf32>
    %39 = vector.extract_strided_slice %37 {offsets = [0, 0], sizes = [8, 256], strides = [1, 1]} : vector<8x384xf32> to vector<8x256xf32>
    %40 = vector.extract_strided_slice %38 {offsets = [0, 0], sizes = [8, 256], strides = [1, 1]} : vector<8x384xf32> to vector<8x256xf32>
    %41 = arith.addf %39, %40 : vector<8x256xf32>
    %42 = arith.negf %41 : vector<8x256xf32>
    %43 = math.exp %42 : vector<8x256xf32>
    %cst_15 = arith.constant 1.000000e+00 : f32
    %44 = vector.broadcast %cst_15 : f32 to vector<8x256xf32>
    %45 = arith.addf %44, %43 : vector<8x256xf32>
    %46 = arith.divf %44, %45 : vector<8x256xf32>
    %47 = vector.extract_strided_slice %46 {offsets = [0, 0], sizes = [8, 128], strides = [1, 1]} : vector<8x256xf32> to vector<8x128xf32>
    %48 = vector.extract_strided_slice %46 {offsets = [0, 128], sizes = [8, 128], strides = [1, 1]} : vector<8x256xf32> to vector<8x128xf32>
    %49 = vector.extract_strided_slice %37 {offsets = [0, 256], sizes = [8, 128], strides = [1, 1]} : vector<8x384xf32> to vector<8x128xf32>
    %50 = vector.extract_strided_slice %38 {offsets = [0, 256], sizes = [8, 128], strides = [1, 1]} : vector<8x384xf32> to vector<8x128xf32>
    %51 = arith.addf %50, %6 : vector<8x128xf32>
    %52 = arith.mulf %47, %51 : vector<8x128xf32>
    %53 = arith.addf %49, %52 : vector<8x128xf32>
    %54 = math.tanh %53 : vector<8x128xf32>
    %55 = arith.subf %30, %54 : vector<8x128xf32>
    %56 = arith.mulf %48, %55 : vector<8x128xf32>
    %57 = arith.addf %54, %56 : vector<8x128xf32>
    %58 = arith.index_cast %c1_i32 : i32 to index
    %c0_16 = arith.constant 0 : index
    %c0_17 = arith.constant 0 : index
    %59 = vector.load %arg5[%58, %c0_16, %c0_17] : memref<8x8x128xf32, #tpu.memory_space<vmem>>, vector<1x8x128xf32>
    %60 = vector.shape_cast %59 : vector<1x8x128xf32> to vector<8x128xf32>
    %61 = vector.shape_cast %57 : vector<8x128xf32> to vector<1x8x128xf32>
    tpu.vector_store %arg5[%58, %c0_16, %c0_17], %61 {strides = array<i32>} : memref<8x8x128xf32, #tpu.memory_space<vmem>>, vector<1x8x128xf32>,
    %c2_i32 = arith.constant 2 : i32
    %62 = arith.index_cast %c2_i32 : i32 to index
    %c0_18 = arith.constant 0 : index
    %c0_19 = arith.constant 0 : index
    %63 = vector.load %arg1[%62, %c0_18, %c0_19] : memref<8x8x384xf32, #tpu.memory_space<vmem>>, vector<1x8x384xf32>
    %64 = vector.shape_cast %63 : vector<1x8x384xf32> to vector<8x384xf32>
    %cst_20 = arith.constant dense<0.000000e+00> : vector<8x384xf32>
    %65 = tpu.matmul %57, %3, %cst_20 {dimension_numbers = #tpu.dot_dimension_numbers<[1], [0], [0], [1], [0, 0, 1, 1], [], []>} : vector<8x128xf32>, vector<128x384xf32>, vector<8x384xf32> -> vector<8x384xf32>
    %66 = vector.extract_strided_slice %64 {offsets = [0, 0], sizes = [8, 256], strides = [1, 1]} : vector<8x384xf32> to vector<8x256xf32>
    %67 = vector.extract_strided_slice %65 {offsets = [0, 0], sizes = [8, 256], strides = [1, 1]} : vector<8x384xf32> to vector<8x256xf32>
    %68 = arith.addf %66, %67 : vector<8x256xf32>
    %69 = arith.negf %68 : vector<8x256xf32>
    %70 = math.exp %69 : vector<8x256xf32>
    %cst_21 = arith.constant 1.000000e+00 : f32
    %71 = vector.broadcast %cst_21 : f32 to vector<8x256xf32>
    %72 = arith.addf %71, %70 : vector<8x256xf32>
    %73 = arith.divf %71, %72 : vector<8x256xf32>
    %74 = vector.extract_strided_slice %73 {offsets = [0, 0], sizes = [8, 128], strides = [1, 1]} : vector<8x256xf32> to vector<8x128xf32>
    %75 = vector.extract_strided_slice %73 {offsets = [0, 128], sizes = [8, 128], strides = [1, 1]} : vector<8x256xf32> to vector<8x128xf32>
    %76 = vector.extract_strided_slice %64 {offsets = [0, 256], sizes = [8, 128], strides = [1, 1]} : vector<8x384xf32> to vector<8x128xf32>
    %77 = vector.extract_strided_slice %65 {offsets = [0, 256], sizes = [8, 128], strides = [1, 1]} : vector<8x384xf32> to vector<8x128xf32>
    %78 = arith.addf %77, %6 : vector<8x128xf32>
    %79 = arith.mulf %74, %78 : vector<8x128xf32>
    %80 = arith.addf %76, %79 : vector<8x128xf32>
    %81 = math.tanh %80 : vector<8x128xf32>
    %82 = arith.subf %57, %81 : vector<8x128xf32>
    %83 = arith.mulf %75, %82 : vector<8x128xf32>
    %84 = arith.addf %81, %83 : vector<8x128xf32>
    %85 = arith.index_cast %c2_i32 : i32 to index
    %c0_22 = arith.constant 0 : index
    %c0_23 = arith.constant 0 : index
    %86 = vector.load %arg5[%85, %c0_22, %c0_23] : memref<8x8x128xf32, #tpu.memory_space<vmem>>, vector<1x8x128xf32>
    %87 = vector.shape_cast %86 : vector<1x8x128xf32> to vector<8x128xf32>
    %88 = vector.shape_cast %84 : vector<8x128xf32> to vector<1x8x128xf32>
    tpu.vector_store %arg5[%85, %c0_22, %c0_23], %88 {strides = array<i32>} : memref<8x8x128xf32, #tpu.memory_space<vmem>>, vector<1x8x128xf32>,
    %c3_i32 = arith.constant 3 : i32
    %89 = arith.index_cast %c3_i32 : i32 to index
    %c0_24 = arith.constant 0 : index
    %c0_25 = arith.constant 0 : index
    %90 = vector.load %arg1[%89, %c0_24, %c0_25] : memref<8x8x384xf32, #tpu.memory_space<vmem>>, vector<1x8x384xf32>
    %91 = vector.shape_cast %90 : vector<1x8x384xf32> to vector<8x384xf32>
    %cst_26 = arith.constant dense<0.000000e+00> : vector<8x384xf32>
    %92 = tpu.matmul %84, %3, %cst_26 {dimension_numbers = #tpu.dot_dimension_numbers<[1], [0], [0], [1], [0, 0, 1, 1], [], []>} : vector<8x128xf32>, vector<128x384xf32>, vector<8x384xf32> -> vector<8x384xf32>
    %93 = vector.extract_strided_slice %91 {offsets = [0, 0], sizes = [8, 256], strides = [1, 1]} : vector<8x384xf32> to vector<8x256xf32>
    %94 = vector.extract_strided_slice %92 {offsets = [0, 0], sizes = [8, 256], strides = [1, 1]} : vector<8x384xf32> to vector<8x256xf32>
    %95 = arith.addf %93, %94 : vector<8x256xf32>
    %96 = arith.negf %95 : vector<8x256xf32>
    %97 = math.exp %96 : vector<8x256xf32>
    %cst_27 = arith.constant 1.000000e+00 : f32
    %98 = vector.broadcast %cst_27 : f32 to vector<8x256xf32>
    %99 = arith.addf %98, %97 : vector<8x256xf32>
    %100 = arith.divf %98, %99 : vector<8x256xf32>
    %101 = vector.extract_strided_slice %100 {offsets = [0, 0], sizes = [8, 128], strides = [1, 1]} : vector<8x256xf32> to vector<8x128xf32>
    %102 = vector.extract_strided_slice %100 {offsets = [0, 128], sizes = [8, 128], strides = [1, 1]} : vector<8x256xf32> to vector<8x128xf32>
    %103 = vector.extract_strided_slice %91 {offsets = [0, 256], sizes = [8, 128], strides = [1, 1]} : vector<8x384xf32> to vector<8x128xf32>
    %104 = vector.extract_strided_slice %92 {offsets = [0, 256], sizes = [8, 128], strides = [1, 1]} : vector<8x384xf32> to vector<8x128xf32>
    %105 = arith.addf %104, %6 : vector<8x128xf32>
    %106 = arith.mulf %101, %105 : vector<8x128xf32>
    %107 = arith.addf %103, %106 : vector<8x128xf32>
    %108 = math.tanh %107 : vector<8x128xf32>
    %109 = arith.subf %84, %108 : vector<8x128xf32>
    %110 = arith.mulf %102, %109 : vector<8x128xf32>
    %111 = arith.addf %108, %110 : vector<8x128xf32>
    %112 = arith.index_cast %c3_i32 : i32 to index
    %c0_28 = arith.constant 0 : index
    %c0_29 = arith.constant 0 : index
    %113 = vector.load %arg5[%112, %c0_28, %c0_29] : memref<8x8x128xf32, #tpu.memory_space<vmem>>, vector<1x8x128xf32>
    %114 = vector.shape_cast %113 : vector<1x8x128xf32> to vector<8x128xf32>
    %115 = vector.shape_cast %111 : vector<8x128xf32> to vector<1x8x128xf32>
    tpu.vector_store %arg5[%112, %c0_28, %c0_29], %115 {strides = array<i32>} : memref<8x8x128xf32, #tpu.memory_space<vmem>>, vector<1x8x128xf32>,
    %c4_i32 = arith.constant 4 : i32
    %116 = arith.index_cast %c4_i32 : i32 to index
    %c0_30 = arith.constant 0 : index
    %c0_31 = arith.constant 0 : index
    %117 = vector.load %arg1[%116, %c0_30, %c0_31] : memref<8x8x384xf32, #tpu.memory_space<vmem>>, vector<1x8x384xf32>
    %118 = vector.shape_cast %117 : vector<1x8x384xf32> to vector<8x384xf32>
    %cst_32 = arith.constant dense<0.000000e+00> : vector<8x384xf32>
    %119 = tpu.matmul %111, %3, %cst_32 {dimension_numbers = #tpu.dot_dimension_numbers<[1], [0], [0], [1], [0, 0, 1, 1], [], []>} : vector<8x128xf32>, vector<128x384xf32>, vector<8x384xf32> -> vector<8x384xf32>
    %120 = vector.extract_strided_slice %118 {offsets = [0, 0], sizes = [8, 256], strides = [1, 1]} : vector<8x384xf32> to vector<8x256xf32>
    %121 = vector.extract_strided_slice %119 {offsets = [0, 0], sizes = [8, 256], strides = [1, 1]} : vector<8x384xf32> to vector<8x256xf32>
    %122 = arith.addf %120, %121 : vector<8x256xf32>
    %123 = arith.negf %122 : vector<8x256xf32>
    %124 = math.exp %123 : vector<8x256xf32>
    %cst_33 = arith.constant 1.000000e+00 : f32
    %125 = vector.broadcast %cst_33 : f32 to vector<8x256xf32>
    %126 = arith.addf %125, %124 : vector<8x256xf32>
    %127 = arith.divf %125, %126 : vector<8x256xf32>
    %128 = vector.extract_strided_slice %127 {offsets = [0, 0], sizes = [8, 128], strides = [1, 1]} : vector<8x256xf32> to vector<8x128xf32>
    %129 = vector.extract_strided_slice %127 {offsets = [0, 128], sizes = [8, 128], strides = [1, 1]} : vector<8x256xf32> to vector<8x128xf32>
    %130 = vector.extract_strided_slice %118 {offsets = [0, 256], sizes = [8, 128], strides = [1, 1]} : vector<8x384xf32> to vector<8x128xf32>
    %131 = vector.extract_strided_slice %119 {offsets = [0, 256], sizes = [8, 128], strides = [1, 1]} : vector<8x384xf32> to vector<8x128xf32>
    %132 = arith.addf %131, %6 : vector<8x128xf32>
    %133 = arith.mulf %128, %132 : vector<8x128xf32>
    %134 = arith.addf %130, %133 : vector<8x128xf32>
    %135 = math.tanh %134 : vector<8x128xf32>
    %136 = arith.subf %111, %135 : vector<8x128xf32>
    %137 = arith.mulf %129, %136 : vector<8x128xf32>
    %138 = arith.addf %135, %137 : vector<8x128xf32>
    %139 = arith.index_cast %c4_i32 : i32 to index
    %c0_34 = arith.constant 0 : index
    %c0_35 = arith.constant 0 : index
    %140 = vector.load %arg5[%139, %c0_34, %c0_35] : memref<8x8x128xf32, #tpu.memory_space<vmem>>, vector<1x8x128xf32>
    %141 = vector.shape_cast %140 : vector<1x8x128xf32> to vector<8x128xf32>
    %142 = vector.shape_cast %138 : vector<8x128xf32> to vector<1x8x128xf32>
    tpu.vector_store %arg5[%139, %c0_34, %c0_35], %142 {strides = array<i32>} : memref<8x8x128xf32, #tpu.memory_space<vmem>>, vector<1x8x128xf32>,
    %c5_i32 = arith.constant 5 : i32
    %143 = arith.index_cast %c5_i32 : i32 to index
    %c0_36 = arith.constant 0 : index
    %c0_37 = arith.constant 0 : index
    %144 = vector.load %arg1[%143, %c0_36, %c0_37] : memref<8x8x384xf32, #tpu.memory_space<vmem>>, vector<1x8x384xf32>
    %145 = vector.shape_cast %144 : vector<1x8x384xf32> to vector<8x384xf32>
    %cst_38 = arith.constant dense<0.000000e+00> : vector<8x384xf32>
    %146 = tpu.matmul %138, %3, %cst_38 {dimension_numbers = #tpu.dot_dimension_numbers<[1], [0], [0], [1], [0, 0, 1, 1], [], []>} : vector<8x128xf32>, vector<128x384xf32>, vector<8x384xf32> -> vector<8x384xf32>
    %147 = vector.extract_strided_slice %145 {offsets = [0, 0], sizes = [8, 256], strides = [1, 1]} : vector<8x384xf32> to vector<8x256xf32>
    %148 = vector.extract_strided_slice %146 {offsets = [0, 0], sizes = [8, 256], strides = [1, 1]} : vector<8x384xf32> to vector<8x256xf32>
    %149 = arith.addf %147, %148 : vector<8x256xf32>
    %150 = arith.negf %149 : vector<8x256xf32>
    %151 = math.exp %150 : vector<8x256xf32>
    %cst_39 = arith.constant 1.000000e+00 : f32
    %152 = vector.broadcast %cst_39 : f32 to vector<8x256xf32>
    %153 = arith.addf %152, %151 : vector<8x256xf32>
    %154 = arith.divf %152, %153 : vector<8x256xf32>
    %155 = vector.extract_strided_slice %154 {offsets = [0, 0], sizes = [8, 128], strides = [1, 1]} : vector<8x256xf32> to vector<8x128xf32>
    %156 = vector.extract_strided_slice %154 {offsets = [0, 128], sizes = [8, 128], strides = [1, 1]} : vector<8x256xf32> to vector<8x128xf32>
    %157 = vector.extract_strided_slice %145 {offsets = [0, 256], sizes = [8, 128], strides = [1, 1]} : vector<8x384xf32> to vector<8x128xf32>
    %158 = vector.extract_strided_slice %146 {offsets = [0, 256], sizes = [8, 128], strides = [1, 1]} : vector<8x384xf32> to vector<8x128xf32>
    %159 = arith.addf %158, %6 : vector<8x128xf32>
    %160 = arith.mulf %155, %159 : vector<8x128xf32>
    %161 = arith.addf %157, %160 : vector<8x128xf32>
    %162 = math.tanh %161 : vector<8x128xf32>
    %163 = arith.subf %138, %162 : vector<8x128xf32>
    %164 = arith.mulf %156, %163 : vector<8x128xf32>
    %165 = arith.addf %162, %164 : vector<8x128xf32>
    %166 = arith.index_cast %c5_i32 : i32 to index
    %c0_40 = arith.constant 0 : index
    %c0_41 = arith.constant 0 : index
    %167 = vector.load %arg5[%166, %c0_40, %c0_41] : memref<8x8x128xf32, #tpu.memory_space<vmem>>, vector<1x8x128xf32>
    %168 = vector.shape_cast %167 : vector<1x8x128xf32> to vector<8x128xf32>
    %169 = vector.shape_cast %165 : vector<8x128xf32> to vector<1x8x128xf32>
    tpu.vector_store %arg5[%166, %c0_40, %c0_41], %169 {strides = array<i32>} : memref<8x8x128xf32, #tpu.memory_space<vmem>>, vector<1x8x128xf32>,
    %c6_i32 = arith.constant 6 : i32
    %170 = arith.index_cast %c6_i32 : i32 to index
    %c0_42 = arith.constant 0 : index
    %c0_43 = arith.constant 0 : index
    %171 = vector.load %arg1[%170, %c0_42, %c0_43] : memref<8x8x384xf32, #tpu.memory_space<vmem>>, vector<1x8x384xf32>
    %172 = vector.shape_cast %171 : vector<1x8x384xf32> to vector<8x384xf32>
    %cst_44 = arith.constant dense<0.000000e+00> : vector<8x384xf32>
    %173 = tpu.matmul %165, %3, %cst_44 {dimension_numbers = #tpu.dot_dimension_numbers<[1], [0], [0], [1], [0, 0, 1, 1], [], []>} : vector<8x128xf32>, vector<128x384xf32>, vector<8x384xf32> -> vector<8x384xf32>
    %174 = vector.extract_strided_slice %172 {offsets = [0, 0], sizes = [8, 256], strides = [1, 1]} : vector<8x384xf32> to vector<8x256xf32>
    %175 = vector.extract_strided_slice %173 {offsets = [0, 0], sizes = [8, 256], strides = [1, 1]} : vector<8x384xf32> to vector<8x256xf32>
    %176 = arith.addf %174, %175 : vector<8x256xf32>
    %177 = arith.negf %176 : vector<8x256xf32>
    %178 = math.exp %177 : vector<8x256xf32>
    %cst_45 = arith.constant 1.000000e+00 : f32
    %179 = vector.broadcast %cst_45 : f32 to vector<8x256xf32>
    %180 = arith.addf %179, %178 : vector<8x256xf32>
    %181 = arith.divf %179, %180 : vector<8x256xf32>
    %182 = vector.extract_strided_slice %181 {offsets = [0, 0], sizes = [8, 128], strides = [1, 1]} : vector<8x256xf32> to vector<8x128xf32>
    %183 = vector.extract_strided_slice %181 {offsets = [0, 128], sizes = [8, 128], strides = [1, 1]} : vector<8x256xf32> to vector<8x128xf32>
    %184 = vector.extract_strided_slice %172 {offsets = [0, 256], sizes = [8, 128], strides = [1, 1]} : vector<8x384xf32> to vector<8x128xf32>
    %185 = vector.extract_strided_slice %173 {offsets = [0, 256], sizes = [8, 128], strides = [1, 1]} : vector<8x384xf32> to vector<8x128xf32>
    %186 = arith.addf %185, %6 : vector<8x128xf32>
    %187 = arith.mulf %182, %186 : vector<8x128xf32>
    %188 = arith.addf %184, %187 : vector<8x128xf32>
    %189 = math.tanh %188 : vector<8x128xf32>
    %190 = arith.subf %165, %189 : vector<8x128xf32>
    %191 = arith.mulf %183, %190 : vector<8x128xf32>
    %192 = arith.addf %189, %191 : vector<8x128xf32>
    %193 = arith.index_cast %c6_i32 : i32 to index
    %c0_46 = arith.constant 0 : index
    %c0_47 = arith.constant 0 : index
    %194 = vector.load %arg5[%193, %c0_46, %c0_47] : memref<8x8x128xf32, #tpu.memory_space<vmem>>, vector<1x8x128xf32>
    %195 = vector.shape_cast %194 : vector<1x8x128xf32> to vector<8x128xf32>
    %196 = vector.shape_cast %192 : vector<8x128xf32> to vector<1x8x128xf32>
    tpu.vector_store %arg5[%193, %c0_46, %c0_47], %196 {strides = array<i32>} : memref<8x8x128xf32, #tpu.memory_space<vmem>>, vector<1x8x128xf32>,
    %c7_i32 = arith.constant 7 : i32
    %197 = arith.index_cast %c7_i32 : i32 to index
    %c0_48 = arith.constant 0 : index
    %c0_49 = arith.constant 0 : index
    %198 = vector.load %arg1[%197, %c0_48, %c0_49] : memref<8x8x384xf32, #tpu.memory_space<vmem>>, vector<1x8x384xf32>
    %199 = vector.shape_cast %198 : vector<1x8x384xf32> to vector<8x384xf32>
    %cst_50 = arith.constant dense<0.000000e+00> : vector<8x384xf32>
    %200 = tpu.matmul %192, %3, %cst_50 {dimension_numbers = #tpu.dot_dimension_numbers<[1], [0], [0], [1], [0, 0, 1, 1], [], []>} : vector<8x128xf32>, vector<128x384xf32>, vector<8x384xf32> -> vector<8x384xf32>
    %201 = vector.extract_strided_slice %199 {offsets = [0, 0], sizes = [8, 256], strides = [1, 1]} : vector<8x384xf32> to vector<8x256xf32>
    %202 = vector.extract_strided_slice %200 {offsets = [0, 0], sizes = [8, 256], strides = [1, 1]} : vector<8x384xf32> to vector<8x256xf32>
    %203 = arith.addf %201, %202 : vector<8x256xf32>
    %204 = arith.negf %203 : vector<8x256xf32>
    %205 = math.exp %204 : vector<8x256xf32>
    %cst_51 = arith.constant 1.000000e+00 : f32
    %206 = vector.broadcast %cst_51 : f32 to vector<8x256xf32>
    %207 = arith.addf %206, %205 : vector<8x256xf32>
    %208 = arith.divf %206, %207 : vector<8x256xf32>
    %209 = vector.extract_strided_slice %208 {offsets = [0, 0], sizes = [8, 128], strides = [1, 1]} : vector<8x256xf32> to vector<8x128xf32>
    %210 = vector.extract_strided_slice %208 {offsets = [0, 128], sizes = [8, 128], strides = [1, 1]} : vector<8x256xf32> to vector<8x128xf32>
    %211 = vector.extract_strided_slice %199 {offsets = [0, 256], sizes = [8, 128], strides = [1, 1]} : vector<8x384xf32> to vector<8x128xf32>
    %212 = vector.extract_strided_slice %200 {offsets = [0, 256], sizes = [8, 128], strides = [1, 1]} : vector<8x384xf32> to vector<8x128xf32>
    %213 = arith.addf %212, %6 : vector<8x128xf32>
    %214 = arith.mulf %209, %213 : vector<8x128xf32>
    %215 = arith.addf %211, %214 : vector<8x128xf32>
    %216 = math.tanh %215 : vector<8x128xf32>
    %217 = arith.subf %192, %216 : vector<8x128xf32>
    %218 = arith.mulf %210, %217 : vector<8x128xf32>
    %219 = arith.addf %216, %218 : vector<8x128xf32>
    %220 = arith.index_cast %c7_i32 : i32 to index
    %c0_52 = arith.constant 0 : index
    %c0_53 = arith.constant 0 : index
    %221 = vector.load %arg5[%220, %c0_52, %c0_53] : memref<8x8x128xf32, #tpu.memory_space<vmem>>, vector<1x8x128xf32>
    %222 = vector.shape_cast %221 : vector<1x8x128xf32> to vector<8x128xf32>
    %223 = vector.shape_cast %219 : vector<8x128xf32> to vector<1x8x128xf32>
    tpu.vector_store %arg5[%220, %c0_52, %c0_53], %223 {strides = array<i32>} : memref<8x8x128xf32, #tpu.memory_space<vmem>>, vector<1x8x128xf32>,
    %c8_i32 = arith.constant 8 : i32
    %c0_54 = arith.constant 0 : index
    %c0_55 = arith.constant 0 : index
    %224 = vector.load %arg6[%c0_54, %c0_55] : memref<8x128xf32, #tpu.memory_space<vmem>>, vector<8x128xf32>
    tpu.vector_store %arg6[%c0_54, %c0_55], %219 {strides = array<i32>} : memref<8x128xf32, #tpu.memory_space<vmem>>, vector<8x128xf32>,
    return
  }
  func.func @transform_0(%arg0: i32) -> (i32, i32, i32) {
    %c0_i32 = arith.constant 0 : i32
    %c0_i32_0 = arith.constant 0 : i32
    %c0_i32_1 = arith.constant 0 : i32
    return %arg0, %c0_i32, %c0_i32_0 : i32, i32, i32
  }
  func.func @transform_1(%arg0: i32) -> (i32, i32) {
    %c0_i32 = arith.constant 0 : i32
    %c0_i32_0 = arith.constant 0 : i32
    %c0_i32_1 = arith.constant 0 : i32
    return %c0_i32, %c0_i32_0 : i32, i32
  }
  func.func @transform_2(%arg0: i32) -> (i32, i32) {
    %c0_i32 = arith.constant 0 : i32
    %c0_i32_0 = arith.constant 0 : i32
    %c0_i32_1 = arith.constant 0 : i32
    return %c0_i32, %c0_i32_0 : i32, i32
  }
  func.func @transform_3(%arg0: i32) -> (i32, i32) {
    %c0_i32 = arith.constant 0 : i32
    %c0_i32_0 = arith.constant 0 : i32
    %c0_i32_1 = arith.constant 0 : i32
    return %c0_i32, %c0_i32_0 : i32, i32
  }
  func.func @transform_4(%arg0: i32) -> (i32, i32, i32) {
    %c0_i32 = arith.constant 0 : i32
    %c0_i32_0 = arith.constant 0 : i32
    %c0_i32_1 = arith.constant 0 : i32
    return %arg0, %c0_i32, %c0_i32_0 : i32, i32, i32
  }
}

module attributes {stable_mosaic.version = 11 : i64} {
  func.func @_input_proj_kernel(%arg0: i32, %arg1: i32, %arg2: memref<64x128xf32, #tpu.memory_space<vmem>>, %arg3: memref<128x384xf32, #tpu.memory_space<vmem>>, %arg4: memref<1x384xf32, #tpu.memory_space<vmem>>, %arg5: memref<64x384xf32, #tpu.memory_space<vmem>>) attributes {dimension_semantics = [#tpu.dimension_semantics<parallel>, #tpu.dimension_semantics<parallel>], iteration_bounds = array<i64: 1, 1>, scalar_prefetch = 0 : i64, scratch_operands = 0 : i64, tpu.core_type = #tpu.core_type<tc>, window_params = [{transform_indices = @transform_0, window_bounds = array<i64: 64, 128>}, {transform_indices = @transform_1, window_bounds = array<i64: 128, 384>}, {transform_indices = @transform_2, window_bounds = array<i64: 1, 384>}, {transform_indices = @transform_3, window_bounds = array<i64: 64, 384>}]} {
    %c0 = arith.constant 0 : index
    %c0_0 = arith.constant 0 : index
    %0 = vector.load %arg2[%c0, %c0_0] : memref<64x128xf32, #tpu.memory_space<vmem>>, vector<64x128xf32>
    %c0_1 = arith.constant 0 : index
    %c0_2 = arith.constant 0 : index
    %1 = vector.load %arg3[%c0_1, %c0_2] : memref<128x384xf32, #tpu.memory_space<vmem>>, vector<128x384xf32>
    %cst = arith.constant dense<0.000000e+00> : vector<64x384xf32>
    %2 = tpu.matmul %0, %1, %cst {dimension_numbers = #tpu.dot_dimension_numbers<[1], [0], [0], [1], [0, 0, 1, 1], [], []>} : vector<64x128xf32>, vector<128x384xf32>, vector<64x384xf32> -> vector<64x384xf32>
    %c0_3 = arith.constant 0 : index
    %c0_4 = arith.constant 0 : index
    %3 = vector.load %arg4[%c0_3, %c0_4] : memref<1x384xf32, #tpu.memory_space<vmem>>, vector<1x384xf32>
    %4 = vector.broadcast %3 : vector<1x384xf32> to vector<64x384xf32>
    %5 = arith.addf %2, %4 : vector<64x384xf32>
    %c0_5 = arith.constant 0 : index
    %c0_6 = arith.constant 0 : index
    %6 = vector.load %arg5[%c0_5, %c0_6] : memref<64x384xf32, #tpu.memory_space<vmem>>, vector<64x384xf32>
    tpu.vector_store %arg5[%c0_5, %c0_6], %5 {strides = array<i32>} : memref<64x384xf32, #tpu.memory_space<vmem>>, vector<64x384xf32>,
    return
  }
  func.func @transform_0(%arg0: i32, %arg1: i32) -> (i32, i32) {
    %c0_i32 = arith.constant 0 : i32
    %c0_i32_0 = arith.constant 0 : i32
    return %arg0, %c0_i32 : i32, i32
  }
  func.func @transform_1(%arg0: i32, %arg1: i32) -> (i32, i32) {
    %c0_i32 = arith.constant 0 : i32
    %c0_i32_0 = arith.constant 0 : i32
    return %c0_i32, %arg1 : i32, i32
  }
  func.func @transform_2(%arg0: i32, %arg1: i32) -> (i32, i32) {
    %c0_i32 = arith.constant 0 : i32
    %c0_i32_0 = arith.constant 0 : i32
    return %c0_i32, %arg1 : i32, i32
  }
  func.func @transform_3(%arg0: i32, %arg1: i32) -> (i32, i32) {
    %c0_i32 = arith.constant 0 : i32
    return %arg0, %arg1 : i32, i32
  }
}

module attributes {stable_mosaic.version = 11 : i64} {
  func.func @_input_proj_kernel(%arg0: i32, %arg1: i32, %arg2: memref<64x128xf32, #tpu.memory_space<vmem>>, %arg3: memref<128x384xf32, #tpu.memory_space<vmem>>, %arg4: memref<1x384xf32, #tpu.memory_space<vmem>>, %arg5: memref<64x384xf32, #tpu.memory_space<vmem>>) attributes {dimension_semantics = [#tpu.dimension_semantics<parallel>, #tpu.dimension_semantics<parallel>], iteration_bounds = array<i64: 1, 1>, scalar_prefetch = 0 : i64, scratch_operands = 0 : i64, tpu.core_type = #tpu.core_type<tc>, window_params = [{transform_indices = @transform_0, window_bounds = array<i64: 64, 128>}, {transform_indices = @transform_1, window_bounds = array<i64: 128, 384>}, {transform_indices = @transform_2, window_bounds = array<i64: 1, 384>}, {transform_indices = @transform_3, window_bounds = array<i64: 64, 384>}]} {
    %c0 = arith.constant 0 : index
    %c0_0 = arith.constant 0 : index
    %0 = vector.load %arg2[%c0, %c0_0] : memref<64x128xf32, #tpu.memory_space<vmem>>, vector<64x128xf32>
    %c0_1 = arith.constant 0 : index
    %c0_2 = arith.constant 0 : index
    %1 = vector.load %arg3[%c0_1, %c0_2] : memref<128x384xf32, #tpu.memory_space<vmem>>, vector<128x384xf32>
    %cst = arith.constant dense<0.000000e+00> : vector<64x384xf32>
    %2 = tpu.matmul %0, %1, %cst {dimension_numbers = #tpu.dot_dimension_numbers<[1], [0], [0], [1], [0, 0, 1, 1], [], []>} : vector<64x128xf32>, vector<128x384xf32>, vector<64x384xf32> -> vector<64x384xf32>
    %c0_3 = arith.constant 0 : index
    %c0_4 = arith.constant 0 : index
    %3 = vector.load %arg4[%c0_3, %c0_4] : memref<1x384xf32, #tpu.memory_space<vmem>>, vector<1x384xf32>
    %4 = vector.broadcast %3 : vector<1x384xf32> to vector<64x384xf32>
    %5 = arith.addf %2, %4 : vector<64x384xf32>
    %c0_5 = arith.constant 0 : index
    %c0_6 = arith.constant 0 : index
    %6 = vector.load %arg5[%c0_5, %c0_6] : memref<64x384xf32, #tpu.memory_space<vmem>>, vector<64x384xf32>
    tpu.vector_store %arg5[%c0_5, %c0_6], %5 {strides = array<i32>} : memref<64x384xf32, #tpu.memory_space<vmem>>, vector<64x384xf32>,
    return
  }
  func.func @transform_0(%arg0: i32, %arg1: i32) -> (i32, i32) {
    %c0_i32 = arith.constant 0 : i32
    %c0_i32_0 = arith.constant 0 : i32
    return %arg0, %c0_i32 : i32, i32
  }
  func.func @transform_1(%arg0: i32, %arg1: i32) -> (i32, i32) {
    %c0_i32 = arith.constant 0 : i32
    %c0_i32_0 = arith.constant 0 : i32
    return %c0_i32, %arg1 : i32, i32
  }
  func.func @transform_2(%arg0: i32, %arg1: i32) -> (i32, i32) {
    %c0_i32 = arith.constant 0 : i32
    %c0_i32_0 = arith.constant 0 : i32
    return %c0_i32, %arg1 : i32, i32
  }
  func.func @transform_3(%arg0: i32, %arg1: i32) -> (i32, i32) {
    %c0_i32 = arith.constant 0 : i32
    return %arg0, %arg1 : i32, i32
  }
}

</mosaic_0001>

<llo_original>
// kernel: gru_networks_forward.6
$region0: #{gru_networks_forward.6}
  #allocation0 [shape = 'u32[]', space=smem, size = 0x4, offset = 0x4, fixed_abs, tag = 'smem constant byte address 0x4 - core index']
  #allocation1 [shape = 'u32[144,128]{1,0:T(1,128)}', space=vmem, size = 0x12000, scoped, tag = 'internal scratch']
  %s0 = inlined_call_operand.vmem [shape: f32[64,128], index: 0, kind: input, shape index: {}]
  %s1 = inlined_call_operand.vmem [shape: f32[128,384], index: 1, kind: input, shape index: {}]
  %s2 = inlined_call_operand.vmem [shape: f32[1,384], index: 2, kind: input, shape index: {}]
  %s3 = inlined_call_operand.vmem [shape: f32[64,384], index: 3, kind: output, shape index: {}]
  %s4 = sld [smem:[#allocation0]]
  $region22: #{gru_networks_forward.6} parent=0
    _
  %s6 = ssub.s32 1, %s4
  %s7 = scalar_select 0, %s6, %s4
  // Predicated region
  $region2: #{gru_networks_forward.6} parent=0 // pred_check
    _
  $region3: #{gru_networks_forward.6} parent=0 // pred_check_branch
    %9 = sbr.rel (0) target = $region5
  $region4: #{gru_networks_forward.6} parent=0 // pred_region
    _
  $region5: #{gru_networks_forward.6} parent=0 // pred_fallthru
    _
  // Predicated region
  $region6: #{gru_networks_forward.6} parent=0 // pred_check
    _
  $region7: #{gru_networks_forward.6} parent=0 // pred_check_branch
    %11 = sbr.rel (0) target = $region9
  $region8: #{gru_networks_forward.6} parent=0 // pred_region
    _
  $region9: #{gru_networks_forward.6} parent=0 // pred_fallthru
    _
  // Predicated region
  $region10: #{gru_networks_forward.6} parent=0 // pred_check
    _
  $region11: #{gru_networks_forward.6} parent=0 // pred_check_branch
    %13 = sbr.rel (0) target = $region13
  $region12: #{gru_networks_forward.6} parent=0 // pred_region
    _
  $region13: #{gru_networks_forward.6} parent=0 // pred_fallthru
    _
  %v14 = vld [vmem:[%s0] sm:$0xff]
  %v15 = vld [vmem:[%s0 + $0x8] sm:$0xff]
  %v16 = vld [vmem:[%s0 + $0x10] sm:$0xff]
  %v17 = vld [vmem:[%s0 + $0x18] sm:$0xff]
  %v18 = vld [vmem:[%s0 + $0x20] sm:$0xff]
  %v19 = vld [vmem:[%s0 + $0x28] sm:$0xff]
  %v20 = vld [vmem:[%s0 + $0x30] sm:$0xff]
  %v21 = vld [vmem:[%s0 + $0x38] sm:$0xff]
  %v22 = vld [vmem:[%s1] sm:$0xff]
  %v23 = vld [vmem:[%s1 + $0x8] sm:$0xff]
  %v24 = vld [vmem:[%s1 + $0x10] sm:$0xff]
  %v25 = vld [vmem:[%s1 + $0x18] sm:$0xff]
  %v26 = vld [vmem:[%s1 + $0x20] sm:$0xff]
  %v27 = vld [vmem:[%s1 + $0x28] sm:$0xff]
  %v28 = vld [vmem:[%s1 + $0x30] sm:$0xff]
  %v29 = vld [vmem:[%s1 + $0x38] sm:$0xff]
  %v30 = vld [vmem:[%s1 + $0x40] sm:$0xff]
  %v31 = vld [vmem:[%s1 + $0x48] sm:$0xff]
  %v32 = vld [vmem:[%s1 + $0x50] sm:$0xff]
  %v33 = vld [vmem:[%s1 + $0x58] sm:$0xff]
  %v34 = vld [vmem:[%s1 + $0x60] sm:$0xff]
  %v35 = vld [vmem:[%s1 + $0x68] sm:$0xff]
  %v36 = vld [vmem:[%s1 + $0x70] sm:$0xff]
  %v37 = vld [vmem:[%s1 + $0x78] sm:$0xff]
  %v38 = vld [vmem:[%s1 + $0x80] sm:$0xff]
  %v39 = vld [vmem:[%s1 + $0x88] sm:$0xff]
  %v40 = vld [vmem:[%s1 + $0x90] sm:$0xff]
  %v41 = vld [vmem:[%s1 + $0x98] sm:$0xff]
  %v42 = vld [vmem:[%s1 + $0xa0] sm:$0xff]
  %v43 = vld [vmem:[%s1 + $0xa8] sm:$0xff]
  %v44 = vld [vmem:[%s1 + $0xb0] sm:$0xff]
  %v45 = vld [vmem:[%s1 + $0xb8] sm:$0xff]
  %v46 = vld [vmem:[%s1 + $0xc0] sm:$0xff]
  %v47 = vld [vmem:[%s1 + $0xc8] sm:$0xff]
  %v48 = vld [vmem:[%s1 + $0xd0] sm:$0xff]
  %v49 = vld [vmem:[%s1 + $0xd8] sm:$0xff]
  %v50 = vld [vmem:[%s1 + $0xe0] sm:$0xff]
  %v51 = vld [vmem:[%s1 + $0xe8] sm:$0xff]
  %v52 = vld [vmem:[%s1 + $0xf0] sm:$0xff]
  %v53 = vld [vmem:[%s1 + $0xf8] sm:$0xff]
  %v54 = vld [vmem:[%s1 + $0x100] sm:$0xff]
  %v55 = vld [vmem:[%s1 + $0x108] sm:$0xff]
  %v56 = vld [vmem:[%s1 + $0x110] sm:$0xff]
  %v57 = vld [vmem:[%s1 + $0x118] sm:$0xff]
  %v58 = vld [vmem:[%s1 + $0x120] sm:$0xff]
  %v59 = vld [vmem:[%s1 + $0x128] sm:$0xff]
  %v60 = vld [vmem:[%s1 + $0x130] sm:$0xff]
  %v61 = vld [vmem:[%s1 + $0x138] sm:$0xff]
  %v62 = vld [vmem:[%s1 + $0x140] sm:$0xff]
  %v63 = vld [vmem:[%s1 + $0x148] sm:$0xff]
  %v64 = vld [vmem:[%s1 + $0x150] sm:$0xff]
  %v65 = vld [vmem:[%s1 + $0x158] sm:$0xff]
  %v66 = vld [vmem:[%s1 + $0x160] sm:$0xff]
  %v67 = vld [vmem:[%s1 + $0x168] sm:$0xff]
  %v68 = vld [vmem:[%s1 + $0x170] sm:$0xff]
  %v69 = vld [vmem:[%s1 + $0x178] sm:$0xff]
  %v70 = vld [vmem:[%s2] sm:$0x7]
  %v72 = vlaneseq
  %v73 = vshrl.u32 %v72, 7
  %v74 = vsub.s32 0, %v73
  %v75 = vrot.slane %v70, %v74
  %v76 = vlaneseq
  %v77 = vshrl.u32 %v76, 7
  %v78 = vsub.s32 1, %v77
  %v79 = vrot.slane %v70, %v78
  %v80 = vlaneseq
  %v81 = vshrl.u32 %v80, 7
  %v82 = vsub.s32 2, %v81
  %v83 = vrot.slane %v70, %v82
  %87 = vmatprep.subr.mxu0 %v23
  %88 = vmatpush1.msra.mxu0 %v22
  %89 = vmatprep.subr.mxu0 %v26
  %90 = vmatpush1.msra.mxu0 %v25
  %91 = vmatprep.subr.mxu0 %v29
  %92 = vmatpush1.msra.mxu0 %v28
  %93 = vmatprep.subr.mxu0 %v32
  %94 = vmatpush1.msra.mxu0 %v31
  %95 = vmatprep.subr.mxu0 %v35
  %96 = vmatpush1.msra.mxu0 %v34
  %97 = vmatprep.subr.mxu0 %v38
  %98 = vmatpush1.msra.mxu0 %v37
  %99 = vmatprep.subr.mxu0 %v41
  %100 = vmatpush1.msra.mxu0 %v40
  %101 = vmatprep.subr.mxu0 %v44
  %102 = vmatpush1.msra.mxu0 %v43
  %103 = vmatprep.subr.mxu0 %v47
  %104 = vmatpush1.msra.mxu0 %v46
  %105 = vmatprep.subr.mxu0 %v50
  %106 = vmatpush1.msra.mxu0 %v49
  %107 = vmatprep.subr.mxu0 %v53
  %108 = vmatpush1.msra.mxu0 %v52
  %109 = vmatprep.subr.mxu0 %v56
  %110 = vmatpush1.msra.mxu0 %v55
  %111 = vmatprep.subr.mxu0 %v59
  %112 = vmatpush1.msra.mxu0 %v58
  %113 = vmatprep.subr.mxu0 %v62
  %114 = vmatpush1.msra.mxu0 %v61
  %115 = vmatprep.subr.mxu0 %v65
  %116 = vmatpush1.msra.mxu0 %v64
  %117 = vmatprep.subr.mxu0 %v68
  %118 = vmatpush1.msra.mxu0 %v67
  %119 = vmatprep.subr.mxu0 0.0
  %120 = vmatpush1.msra.mxu0 0.0
  %121 = vmatprep.subr.mxu0 0.0
  %122 = vmatpush1.msra.mxu0 0.0
  %123 = vmatprep.subr.mxu0 0.0
  %124 = vmatpush1.msra.mxu0 0.0
  %125 = vmatprep.subr.mxu0 0.0
  %126 = vmatpush1.msra.mxu0 0.0
  %127 = vmatprep.subr.mxu0 0.0
  %128 = vmatpush1.msra.mxu0 0.0
  %129 = vmatprep.subr.mxu0 0.0
  %130 = vmatpush1.msra.mxu0 0.0
  %131 = vmatprep.subr.mxu0 0.0
  %132 = vmatpush1.msra.mxu0 0.0
  %133 = vmatprep.subr.mxu0 0.0
  %134 = vmatpush1.msra.mxu0 0.0
  %135 = vmatprep.subr.mxu0 0.0
  %136 = vmatpush1.msra.mxu0 0.0
  %137 = vmatprep.subr.mxu0 0.0
  %138 = vmatpush1.msra.mxu0 0.0
  %139 = vmatprep.subr.mxu0 0.0
  %140 = vmatpush1.msra.mxu0 0.0
  %141 = vmatprep.subr.mxu0 0.0
  %142 = vmatpush1.msra.mxu0 0.0
  %143 = vmatprep.subr.mxu0 0.0
  %144 = vmatpush1.msra.mxu0 0.0
  %145 = vmatprep.subr.mxu0 0.0
  %146 = vmatpush1.msra.mxu0 0.0
  %147 = vmatprep.subr.mxu0 0.0
  %148 = vmatpush1.msra.mxu0 0.0
  %149 = vmatprep.subr.mxu0 0.0
  %150 = vmatpush1.msra.mxu0 0.0
  %151 = vmatprep.mubr.f32.mxu0 0.0
  %152 = vmatmul.mubr.f32.gmra.mrb[0].mxu0 %v14
  %v153 = vpop.f32.mrb[0].mxu0
  %v154 = vadd.f32 %v75, %v153
  %v155 = vpop.f32.mrb[0].mxu0
  %v156 = vadd.f32 %v79, %v155
  %157 = vmatprep.mubr.f32.mxu0 0.0
  %158 = vmatmul.mubr.f32.gmra.mrb[0].mxu0 %v15
  %v159 = vpop.f32.mrb[0].mxu0
  %v160 = vadd.f32 %v75, %v159
  %v161 = vpop.f32.mrb[0].mxu0
  %v162 = vadd.f32 %v79, %v161
  %163 = vmatprep.mubr.f32.mxu0 0.0
  %164 = vmatmul.mubr.f32.gmra.mrb[0].mxu0 %v16
  %v165 = vpop.f32.mrb[0].mxu0
  %v166 = vadd.f32 %v75, %v165
  %v167 = vpop.f32.mrb[0].mxu0
  %v168 = vadd.f32 %v79, %v167
  %169 = vmatprep.mubr.f32.mxu0 0.0
  %170 = vmatmul.mubr.f32.gmra.mrb[0].mxu0 %v17
  %v171 = vpop.f32.mrb[0].mxu0
  %v172 = vadd.f32 %v75, %v171
  %v173 = vpop.f32.mrb[0].mxu0
  %v174 = vadd.f32 %v79, %v173
  %175 = vmatprep.mubr.f32.mxu0 0.0
  %176 = vmatmul.mubr.f32.gmra.mrb[0].mxu0 %v18
  %v177 = vpop.f32.mrb[0].mxu0
  %v178 = vadd.f32 %v75, %v177
  %v179 = vpop.f32.mrb[0].mxu0
  %v180 = vadd.f32 %v79, %v179
  %181 = vmatprep.mubr.f32.mxu0 0.0
  %182 = vmatmul.mubr.f32.gmra.mrb[0].mxu0 %v19
  %v183 = vpop.f32.mrb[0].mxu0
  %v184 = vadd.f32 %v75, %v183
  %v185 = vpop.f32.mrb[0].mxu0
  %v186 = vadd.f32 %v79, %v185
  %187 = vmatprep.mubr.f32.mxu0 0.0
  %188 = vmatmul.mubr.f32.gmra.mrb[0].mxu0 %v20
  %v189 = vpop.f32.mrb[0].mxu0
  %v190 = vadd.f32 %v75, %v189
  %v191 = vpop.f32.mrb[0].mxu0
  %v192 = vadd.f32 %v79, %v191
  %193 = vmatprep.mubr.f32.mxu0 0.0
  %194 = vmatmul.mubr.f32.gmra.mrb[0].mxu0 %v21
  %v195 = vpop.f32.mrb[0].mxu0
  %v196 = vadd.f32 %v75, %v195
  %v197 = vpop.f32.mrb[0].mxu0
  %v198 = vadd.f32 %v79, %v197
  %199 = vdwg.mxu0
  %200 = vmatprep.subr.mxu0 0.0
  %201 = vmatpush1.msra.mxu0 %v24
  %202 = vmatprep.subr.mxu0 0.0
  %203 = vmatpush1.msra.mxu0 %v27
  %204 = vmatprep.subr.mxu0 0.0
  %205 = vmatpush1.msra.mxu0 %v30
  %206 = vmatprep.subr.mxu0 0.0
  %207 = vmatpush1.msra.mxu0 %v33
  %208 = vmatprep.subr.mxu0 0.0
  %209 = vmatpush1.msra.mxu0 %v36
  %210 = vmatprep.subr.mxu0 0.0
  %211 = vmatpush1.msra.mxu0 %v39
  %212 = vmatprep.subr.mxu0 0.0
  %213 = vmatpush1.msra.mxu0 %v42
  %214 = vmatprep.subr.mxu0 0.0
  %215 = vmatpush1.msra.mxu0 %v45
  %216 = vmatprep.subr.mxu0 0.0
  %217 = vmatpush1.msra.mxu0 %v48
  %218 = vmatprep.subr.mxu0 0.0
  %219 = vmatpush1.msra.mxu0 %v51
  %220 = vmatprep.subr.mxu0 0.0
  %221 = vmatpush1.msra.mxu0 %v54
  %222 = vmatprep.subr.mxu0 0.0
  %223 = vmatpush1.msra.mxu0 %v57
  %224 = vmatprep.subr.mxu0 0.0
  %225 = vmatpush1.msra.mxu0 %v60
  %226 = vmatprep.subr.mxu0 0.0
  %227 = vmatpush1.msra.mxu0 %v63
  %228 = vmatprep.subr.mxu0 0.0
  %229 = vmatpush1.msra.mxu0 %v66
  %230 = vmatprep.subr.mxu0 0.0
  %231 = vmatpush1.msra.mxu0 %v69
  %232 = vmatprep.subr.mxu0 0.0
  %233 = vmatpush1.msra.mxu0 0.0
  %234 = vmatprep.subr.mxu0 0.0
  %235 = vmatpush1.msra.mxu0 0.0
  %236 = vmatprep.subr.mxu0 0.0
  %237 = vmatpush1.msra.mxu0 0.0
  %238 = vmatprep.subr.mxu0 0.0
  %239 = vmatpush1.msra.mxu0 0.0
  %240 = vmatprep.subr.mxu0 0.0
  %241 = vmatpush1.msra.mxu0 0.0
  %242 = vmatprep.subr.mxu0 0.0
  %243 = vmatpush1.msra.mxu0 0.0
  %244 = vmatprep.subr.mxu0 0.0
  %245 = vmatpush1.msra.mxu0 0.0
  %246 = vmatprep.subr.mxu0 0.0
  %247 = vmatpush1.msra.mxu0 0.0
  %248 = vmatprep.subr.mxu0 0.0
  %249 = vmatpush1.msra.mxu0 0.0
  %250 = vmatprep.subr.mxu0 0.0
  %251 = vmatpush1.msra.mxu0 0.0
  %252 = vmatprep.subr.mxu0 0.0
  %253 = vmatpush1.msra.mxu0 0.0
  %254 = vmatprep.subr.mxu0 0.0
  %255 = vmatpush1.msra.mxu0 0.0
  %256 = vmatprep.subr.mxu0 0.0
  %257 = vmatpush1.msra.mxu0 0.0
  %258 = vmatprep.subr.mxu0 0.0
  %259 = vmatpush1.msra.mxu0 0.0
  %260 = vmatprep.subr.mxu0 0.0
  %261 = vmatpush1.msra.mxu0 0.0
  %262 = vmatprep.subr.mxu0 0.0
  %263 = vmatpush1.msra.mxu0 0.0
  %264 = vmatprep.mubr.f32.mxu0 0.0
  %265 = vmatmul.mubr.f32.gmra.mrb[0].mxu0 %v14
  %v266 = vpop.f32.mrb[0].mxu0
  %v267 = vadd.f32 %v83, %v266
  %v268 = vpop.f32.mrb[0].mxu0
  %269 = vmatprep.mubr.f32.mxu0 0.0
  %270 = vmatmul.mubr.f32.gmra.mrb[0].mxu0 %v15
  %v271 = vpop.f32.mrb[0].mxu0
  %v272 = vadd.f32 %v83, %v271
  %v273 = vpop.f32.mrb[0].mxu0
  %274 = vmatprep.mubr.f32.mxu0 0.0
  %275 = vmatmul.mubr.f32.gmra.mrb[0].mxu0 %v16
  %v276 = vpop.f32.mrb[0].mxu0
  %v277 = vadd.f32 %v83, %v276
  %v278 = vpop.f32.mrb[0].mxu0
  %279 = vmatprep.mubr.f32.mxu0 0.0
  %280 = vmatmul.mubr.f32.gmra.mrb[0].mxu0 %v17
  %v281 = vpop.f32.mrb[0].mxu0
  %v282 = vadd.f32 %v83, %v281
  %v283 = vpop.f32.mrb[0].mxu0
  %284 = vmatprep.mubr.f32.mxu0 0.0
  %285 = vmatmul.mubr.f32.gmra.mrb[0].mxu0 %v18
  %v286 = vpop.f32.mrb[0].mxu0
  %v287 = vadd.f32 %v83, %v286
  %v288 = vpop.f32.mrb[0].mxu0
  %289 = vmatprep.mubr.f32.mxu0 0.0
  %290 = vmatmul.mubr.f32.gmra.mrb[0].mxu0 %v19
  %v291 = vpop.f32.mrb[0].mxu0
  %v292 = vadd.f32 %v83, %v291
  %v293 = vpop.f32.mrb[0].mxu0
  %294 = vmatprep.mubr.f32.mxu0 0.0
  %295 = vmatmul.mubr.f32.gmra.mrb[0].mxu0 %v20
  %v296 = vpop.f32.mrb[0].mxu0
  %v297 = vadd.f32 %v83, %v296
  %v298 = vpop.f32.mrb[0].mxu0
  %299 = vmatprep.mubr.f32.mxu0 0.0
  %300 = vmatmul.mubr.f32.gmra.mrb[0].mxu0 %v21
  %v301 = vpop.f32.mrb[0].mxu0
  %v302 = vadd.f32 %v83, %v301
  %v303 = vpop.f32.mrb[0].mxu0
  %304 = vdwg.mxu0
  %305 = vst [vmem:[%s3] sm:$0xff] %v154
  %306 = vst [vmem:[%s3 + $0x8] sm:$0xff] %v156
  %307 = vst [vmem:[%s3 + $0x10] sm:$0xff] %v267
  %308 = vst [vmem:[%s3 + $0x18] sm:$0xff] %v160
  %309 = vst [vmem:[%s3 + $0x20] sm:$0xff] %v162
  %310 = vst [vmem:[%s3 + $0x28] sm:$0xff] %v272
  %311 = vst [vmem:[%s3 + $0x30] sm:$0xff] %v166
  %312 = vst [vmem:[%s3 + $0x38] sm:$0xff] %v168
  %313 = vst [vmem:[%s3 + $0x40] sm:$0xff] %v277
  %314 = vst [vmem:[%s3 + $0x48] sm:$0xff] %v172
  %315 = vst [vmem:[%s3 + $0x50] sm:$0xff] %v174
  %316 = vst [vmem:[%s3 + $0x58] sm:$0xff] %v282
  %317 = vst [vmem:[%s3 + $0x60] sm:$0xff] %v178
  %318 = vst [vmem:[%s3 + $0x68] sm:$0xff] %v180
  %319 = vst [vmem:[%s3 + $0x70] sm:$0xff] %v287
  %320 = vst [vmem:[%s3 + $0x78] sm:$0xff] %v184
  %321 = vst [vmem:[%s3 + $0x80] sm:$0xff] %v186
  %322 = vst [vmem:[%s3 + $0x88] sm:$0xff] %v292
  %323 = vst [vmem:[%s3 + $0x90] sm:$0xff] %v190
  %324 = vst [vmem:[%s3 + $0x98] sm:$0xff] %v192
  %325 = vst [vmem:[%s3 + $0xa0] sm:$0xff] %v297
  %326 = vst [vmem:[%s3 + $0xa8] sm:$0xff] %v196
  %327 = vst [vmem:[%s3 + $0xb0] sm:$0xff] %v198
  %328 = vst [vmem:[%s3 + $0xb8] sm:$0xff] %v302
  // Predicated region
  $region14: #{gru_networks_forward.6} parent=0 // pred_check
    _
  $region15: #{gru_networks_forward.6} parent=0 // pred_check_branch
    %330 = sbr.rel (0) target = $region17
  $region16: #{gru_networks_forward.6} parent=0 // pred_region
    _
  $region17: #{gru_networks_forward.6} parent=0 // pred_fallthru
    _
  // Predicated region
  $region18: #{gru_networks_forward.6} parent=0 // pred_check
    _
  $region19: #{gru_networks_forward.6} parent=0 // pred_check_branch
    %332 = sbr.rel (0) target = $region21
  $region20: #{gru_networks_forward.6} parent=0 // pred_region
    _
  $region21: #{gru_networks_forward.6} parent=0 // pred_fallthru
    _

// kernel: gru_networks_forward.4
$region0: #{gru_networks_forward.4}
  #allocation0 [shape = 'u32[]', space=smem, size = 0x4, offset = 0x4, fixed_abs, tag = 'smem constant byte address 0x4 - core index']
  #allocation1 [shape = 'u32[144,128]{1,0:T(1,128)}', space=vmem, size = 0x12000, scoped, tag = 'internal scratch']
  %s0 = inlined_call_operand.vmem [shape: f32[64,128], index: 0, kind: input, shape index: {}]
  %s1 = inlined_call_operand.hbm [shape: f32[128,384], index: 1, kind: input, shape index: {}]
  %s2 = inlined_call_operand.vmem [shape: f32[1,384], index: 2, kind: input, shape index: {}]
  %s3 = inlined_call_operand.vmem [shape: f32[64,384], index: 3, kind: output, shape index: {}]
  %s4 = sld [smem:[#allocation0]]
  $region26: #{gru_networks_forward.4} parent=0
    _
  %s6 = ssub.s32 1, %s4
  %s7 = scalar_select 0, %s6, %s4
  $region1: #{gru_networks_forward.4} parent=0
    #allocation2 [shape = 'u8[196608]{0}', space=vmem, size = 0x30000, scoped, tag = 'input window, operand 1, single buffered']
    #allocation3 [shape = 's32[1]{0}', space=sflag, size = 0x4, scoped, tag = 'scoped memory for gru_networks_forward.4']
    %8 = vsyncpa [#allocation3], 0
    // Predicated region
    $region2: #{gru_networks_forward.4} parent=1 // pred_check
      _
    $region3: #{gru_networks_forward.4} parent=1 // pred_check_branch
      %10 = sbr.rel (0) target = $region5
    $region4: #{gru_networks_forward.4} parent=1 // pred_region
      _
    $region5: #{gru_networks_forward.4} parent=1 // pred_fallthru
      _
    // Predicated region
    $region6: #{gru_networks_forward.4} parent=1 // pred_check
      _
    $region7: #{gru_networks_forward.4} parent=1 // pred_check_branch
      %12 = sbr.rel (0) target = $region9
    $region8: #{gru_networks_forward.4} parent=1 // pred_region
      %s14 = ssub.s32 6144, 6144
      %15 = vsyncadd [#allocation3], %s14
      %s16 = sshll.u32 [#allocation2], 4
      %s17 = int_to_ptr.vmem [resolvable:$true] %s16
      %22 = dma.hbm_to_vmem [thread:$0]  %s1, 6144, %s17, [#allocation3], 384, 384, 24
    $region9: #{gru_networks_forward.4} parent=1 // pred_fallthru
      _
    // Predicated region
    $region10: #{gru_networks_forward.4} parent=1 // pred_check
      _
    $region11: #{gru_networks_forward.4} parent=1 // pred_check_branch
      %24 = sbr.rel (0) target = $region13
    $region12: #{gru_networks_forward.4} parent=1 // pred_region
      _
    $region13: #{gru_networks_forward.4} parent=1 // pred_fallthru
      _
    // Predicated region
    $region14: #{gru_networks_forward.4} parent=1 // pred_check
      _
    $region15: #{gru_networks_forward.4} parent=1 // pred_check_branch
      %26 = sbr.rel (0) target = $region17
    $region16: #{gru_networks_forward.4} parent=1 // pred_region
      %27 = dma.done [#allocation3], 6144
    $region17: #{gru_networks_forward.4} parent=1 // pred_fallthru
      _
    %v28 = vld [vmem:[%s0] sm:$0xff]
    %v29 = vld [vmem:[%s0 + $0x8] sm:$0xff]
    %v30 = vld [vmem:[%s0 + $0x10] sm:$0xff]
    %v31 = vld [vmem:[%s0 + $0x18] sm:$0xff]
    %v32 = vld [vmem:[%s0 + $0x20] sm:$0xff]
    %v33 = vld [vmem:[%s0 + $0x28] sm:$0xff]
    %v34 = vld [vmem:[%s0 + $0x30] sm:$0xff]
    %v35 = vld [vmem:[%s0 + $0x38] sm:$0xff]
    %v36 = vld [vmem:[#allocation2] sm:$0xff]
    %v37 = vld [vmem:[#allocation2 + $0x8] sm:$0xff]
    %v38 = vld [vmem:[#allocation2 + $0x10] sm:$0xff]
    %v39 = vld [vmem:[#allocation2 + $0x18] sm:$0xff]
    %v40 = vld [vmem:[#allocation2 + $0x20] sm:$0xff]
    %v41 = vld [vmem:[#allocation2 + $0x28] sm:$0xff]
    %v42 = vld [vmem:[#allocation2 + $0x30] sm:$0xff]
    %v43 = vld [vmem:[#allocation2 + $0x38] sm:$0xff]
    %v44 = vld [vmem:[#allocation2 + $0x40] sm:$0xff]
    %v45 = vld [vmem:[#allocation2 + $0x48] sm:$0xff]
    %v46 = vld [vmem:[#allocation2 + $0x50] sm:$0xff]
    %v47 = vld [vmem:[#allocation2 + $0x58] sm:$0xff]
    %v48 = vld [vmem:[#allocation2 + $0x60] sm:$0xff]
    %v49 = vld [vmem:[#allocation2 + $0x68] sm:$0xff]
    %v50 = vld [vmem:[#allocation2 + $0x70] sm:$0xff]
    %v51 = vld [vmem:[#allocation2 + $0x78] sm:$0xff]
    %v52 = vld [vmem:[#allocation2 + $0x80] sm:$0xff]
    %v53 = vld [vmem:[#allocation2 + $0x88] sm:$0xff]
    %v54 = vld [vmem:[#allocation2 + $0x90] sm:$0xff]
    %v55 = vld [vmem:[#allocation2 + $0x98] sm:$0xff]
    %v56 = vld [vmem:[#allocation2 + $0xa0] sm:$0xff]
    %v57 = vld [vmem:[#allocation2 + $0xa8] sm:$0xff]
    %v58 = vld [vmem:[#allocation2 + $0xb0] sm:$0xff]
    %v59 = vld [vmem:[#allocation2 + $0xb8] sm:$0xff]
    %v60 = vld [vmem:[#allocation2 + $0xc0] sm:$0xff]
    %v61 = vld [vmem:[#allocation2 + $0xc8] sm:$0xff]
    %v62 = vld [vmem:[#allocation2 + $0xd0] sm:$0xff]
    %v63 = vld [vmem:[#allocation2 + $0xd8] sm:$0xff]
    %v64 = vld [vmem:[#allocation2 + $0xe0] sm:$0xff]
    %v65 = vld [vmem:[#allocation2 + $0xe8] sm:$0xff]
    %v66 = vld [vmem:[#allocation2 + $0xf0] sm:$0xff]
    %v67 = vld [vmem:[#allocation2 + $0xf8] sm:$0xff]
    %v68 = vld [vmem:[#allocation2 + $0x100] sm:$0xff]
    %v69 = vld [vmem:[#allocation2 + $0x108] sm:$0xff]
    %v70 = vld [vmem:[#allocation2 + $0x110] sm:$0xff]
    %v71 = vld [vmem:[#allocation2 + $0x118] sm:$0xff]
    %v72 = vld [vmem:[#allocation2 + $0x120] sm:$0xff]
    %v73 = vld [vmem:[#allocation2 + $0x128] sm:$0xff]
    %v74 = vld [vmem:[#allocation2 + $0x130] sm:$0xff]
    %v75 = vld [vmem:[#allocation2 + $0x138] sm:$0xff]
    %v76 = vld [vmem:[#allocation2 + $0x140] sm:$0xff]
    %v77 = vld [vmem:[#allocation2 + $0x148] sm:$0xff]
    %v78 = vld [vmem:[#allocation2 + $0x150] sm:$0xff]
    %v79 = vld [vmem:[#allocation2 + $0x158] sm:$0xff]
    %v80 = vld [vmem:[#allocation2 + $0x160] sm:$0xff]
    %v81 = vld [vmem:[#allocation2 + $0x168] sm:$0xff]
    %v82 = vld [vmem:[#allocation2 + $0x170] sm:$0xff]
    %v83 = vld [vmem:[#allocation2 + $0x178] sm:$0xff]
    %v84 = vld [vmem:[%s2] sm:$0x7]
    %v86 = vlaneseq
    %v87 = vshrl.u32 %v86, 7
    %v88 = vsub.s32 0, %v87
    %v89 = vrot.slane %v84, %v88
    %v90 = vlaneseq
    %v91 = vshrl.u32 %v90, 7
    %v92 = vsub.s32 1, %v91
    %v93 = vrot.slane %v84, %v92
    %v94 = vlaneseq
    %v95 = vshrl.u32 %v94, 7
    %v96 = vsub.s32 2, %v95
    %v97 = vrot.slane %v84, %v96
    %101 = vmatprep.subr.mxu0 %v37
    %102 = vmatpush1.msra.mxu0 %v36
    %103 = vmatprep.subr.mxu0 %v40
    %104 = vmatpush1.msra.mxu0 %v39
    %105 = vmatprep.subr.mxu0 %v43
    %106 = vmatpush1.msra.mxu0 %v42
    %107 = vmatprep.subr.mxu0 %v46
    %108 = vmatpush1.msra.mxu0 %v45
    %109 = vmatprep.subr.mxu0 %v49
    %110 = vmatpush1.msra.mxu0 %v48
    %111 = vmatprep.subr.mxu0 %v52
    %112 = vmatpush1.msra.mxu0 %v51
    %113 = vmatprep.subr.mxu0 %v55
    %114 = vmatpush1.msra.mxu0 %v54
    %115 = vmatprep.subr.mxu0 %v58
    %116 = vmatpush1.msra.mxu0 %v57
    %117 = vmatprep.subr.mxu0 %v61
    %118 = vmatpush1.msra.mxu0 %v60
    %119 = vmatprep.subr.mxu0 %v64
    %120 = vmatpush1.msra.mxu0 %v63
    %121 = vmatprep.subr.mxu0 %v67
    %122 = vmatpush1.msra.mxu0 %v66
    %123 = vmatprep.subr.mxu0 %v70
    %124 = vmatpush1.msra.mxu0 %v69
    %125 = vmatprep.subr.mxu0 %v73
    %126 = vmatpush1.msra.mxu0 %v72
    %127 = vmatprep.subr.mxu0 %v76
    %128 = vmatpush1.msra.mxu0 %v75
    %129 = vmatprep.subr.mxu0 %v79
    %130 = vmatpush1.msra.mxu0 %v78
    %131 = vmatprep.subr.mxu0 %v82
    %132 = vmatpush1.msra.mxu0 %v81
    %133 = vmatprep.subr.mxu0 0.0
    %134 = vmatpush1.msra.mxu0 0.0
    %135 = vmatprep.subr.mxu0 0.0
    %136 = vmatpush1.msra.mxu0 0.0
    %137 = vmatprep.subr.mxu0 0.0
    %138 = vmatpush1.msra.mxu0 0.0
    %139 = vmatprep.subr.mxu0 0.0
    %140 = vmatpush1.msra.mxu0 0.0
    %141 = vmatprep.subr.mxu0 0.0
    %142 = vmatpush1.msra.mxu0 0.0
    %143 = vmatprep.subr.mxu0 0.0
    %144 = vmatpush1.msra.mxu0 0.0
    %145 = vmatprep.subr.mxu0 0.0
    %146 = vmatpush1.msra.mxu0 0.0
    %147 = vmatprep.subr.mxu0 0.0
    %148 = vmatpush1.msra.mxu0 0.0
    %149 = vmatprep.subr.mxu0 0.0
    %150 = vmatpush1.msra.mxu0 0.0
    %151 = vmatprep.subr.mxu0 0.0
    %152 = vmatpush1.msra.mxu0 0.0
    %153 = vmatprep.subr.mxu0 0.0
    %154 = vmatpush1.msra.mxu0 0.0
    %155 = vmatprep.subr.mxu0 0.0
    %156 = vmatpush1.msra.mxu0 0.0
    %157 = vmatprep.subr.mxu0 0.0
    %158 = vmatpush1.msra.mxu0 0.0
    %159 = vmatprep.subr.mxu0 0.0
    %160 = vmatpush1.msra.mxu0 0.0
    %161 = vmatprep.subr.mxu0 0.0
    %162 = vmatpush1.msra.mxu0 0.0
    %163 = vmatprep.subr.mxu0 0.0
    %164 = vmatpush1.msra.mxu0 0.0
    %165 = vmatprep.mubr.f32.mxu0 0.0
    %166 = vmatmul.mubr.f32.gmra.mrb[0].mxu0 %v28
    %v167 = vpop.f32.mrb[0].mxu0
    %v168 = vadd.f32 %v89, %v167
    %v169 = vpop.f32.mrb[0].mxu0
    %v170 = vadd.f32 %v93, %v169
    %171 = vmatprep.mubr.f32.mxu0 0.0
    %172 = vmatmul.mubr.f32.gmra.mrb[0].mxu0 %v29
    %v173 = vpop.f32.mrb[0].mxu0
    %v174 = vadd.f32 %v89, %v173
    %v175 = vpop.f32.mrb[0].mxu0
    %v176 = vadd.f32 %v93, %v175
    %177 = vmatprep.mubr.f32.mxu0 0.0
    %178 = vmatmul.mubr.f32.gmra.mrb[0].mxu0 %v30
    %v179 = vpop.f32.mrb[0].mxu0
    %v180 = vadd.f32 %v89, %v179
    %v181 = vpop.f32.mrb[0].mxu0
    %v182 = vadd.f32 %v93, %v181
    %183 = vmatprep.mubr.f32.mxu0 0.0
    %184 = vmatmul.mubr.f32.gmra.mrb[0].mxu0 %v31
    %v185 = vpop.f32.mrb[0].mxu0
    %v186 = vadd.f32 %v89, %v185
    %v187 = vpop.f32.mrb[0].mxu0
    %v188 = vadd.f32 %v93, %v187
    %189 = vmatprep.mubr.f32.mxu0 0.0
    %190 = vmatmul.mubr.f32.gmra.mrb[0].mxu0 %v32
    %v191 = vpop.f32.mrb[0].mxu0
    %v192 = vadd.f32 %v89, %v191
    %v193 = vpop.f32.mrb[0].mxu0
    %v194 = vadd.f32 %v93, %v193
    %195 = vmatprep.mubr.f32.mxu0 0.0
    %196 = vmatmul.mubr.f32.gmra.mrb[0].mxu0 %v33
    %v197 = vpop.f32.mrb[0].mxu0
    %v198 = vadd.f32 %v89, %v197
    %v199 = vpop.f32.mrb[0].mxu0
    %v200 = vadd.f32 %v93, %v199
    %201 = vmatprep.mubr.f32.mxu0 0.0
    %202 = vmatmul.mubr.f32.gmra.mrb[0].mxu0 %v34
    %v203 = vpop.f32.mrb[0].mxu0
    %v204 = vadd.f32 %v89, %v203
    %v205 = vpop.f32.mrb[0].mxu0
    %v206 = vadd.f32 %v93, %v205
    %207 = vmatprep.mubr.f32.mxu0 0.0
    %208 = vmatmul.mubr.f32.gmra.mrb[0].mxu0 %v35
    %v209 = vpop.f32.mrb[0].mxu0
    %v210 = vadd.f32 %v89, %v209
    %v211 = vpop.f32.mrb[0].mxu0
    %v212 = vadd.f32 %v93, %v211
    %213 = vdwg.mxu0
    %214 = vmatprep.subr.mxu0 0.0
    %215 = vmatpush1.msra.mxu0 %v38
    %216 = vmatprep.subr.mxu0 0.0
    %217 = vmatpush1.msra.mxu0 %v41
    %218 = vmatprep.subr.mxu0 0.0
    %219 = vmatpush1.msra.mxu0 %v44
    %220 = vmatprep.subr.mxu0 0.0
    %221 = vmatpush1.msra.mxu0 %v47
    %222 = vmatprep.subr.mxu0 0.0
    %223 = vmatpush1.msra.mxu0 %v50
    %224 = vmatprep.subr.mxu0 0.0
    %225 = vmatpush1.msra.mxu0 %v53
    %226 = vmatprep.subr.mxu0 0.0
    %227 = vmatpush1.msra.mxu0 %v56
    %228 = vmatprep.subr.mxu0 0.0
    %229 = vmatpush1.msra.mxu0 %v59
    %230 = vmatprep.subr.mxu0 0.0
    %231 = vmatpush1.msra.mxu0 %v62
    %232 = vmatprep.subr.mxu0 0.0
    %233 = vmatpush1.msra.mxu0 %v65
    %234 = vmatprep.subr.mxu0 0.0
    %235 = vmatpush1.msra.mxu0 %v68
    %236 = vmatprep.subr.mxu0 0.0
    %237 = vmatpush1.msra.mxu0 %v71
    %238 = vmatprep.subr.mxu0 0.0
    %239 = vmatpush1.msra.mxu0 %v74
    %240 = vmatprep.subr.mxu0 0.0
    %241 = vmatpush1.msra.mxu0 %v77
    %242 = vmatprep.subr.mxu0 0.0
    %243 = vmatpush1.msra.mxu0 %v80
    %244 = vmatprep.subr.mxu0 0.0
    %245 = vmatpush1.msra.mxu0 %v83
    %246 = vmatprep.subr.mxu0 0.0
    %247 = vmatpush1.msra.mxu0 0.0
    %248 = vmatprep.subr.mxu0 0.0
    %249 = vmatpush1.msra.mxu0 0.0
    %250 = vmatprep.subr.mxu0 0.0
    %251 = vmatpush1.msra.mxu0 0.0
    %252 = vmatprep.subr.mxu0 0.0
    %253 = vmatpush1.msra.mxu0 0.0
    %254 = vmatprep.subr.mxu0 0.0
    %255 = vmatpush1.msra.mxu0 0.0
    %256 = vmatprep.subr.mxu0 0.0
    %257 = vmatpush1.msra.mxu0 0.0
    %258 = vmatprep.subr.mxu0 0.0
    %259 = vmatpush1.msra.mxu0 0.0
    %260 = vmatprep.subr.mxu0 0.0
    %261 = vmatpush1.msra.mxu0 0.0
    %262 = vmatprep.subr.mxu0 0.0
    %263 = vmatpush1.msra.mxu0 0.0
    %264 = vmatprep.subr.mxu0 0.0
    %265 = vmatpush1.msra.mxu0 0.0
    %266 = vmatprep.subr.mxu0 0.0
    %267 = vmatpush1.msra.mxu0 0.0
    %268 = vmatprep.subr.mxu0 0.0
    %269 = vmatpush1.msra.mxu0 0.0
    %270 = vmatprep.subr.mxu0 0.0
    %271 = vmatpush1.msra.mxu0 0.0
    %272 = vmatprep.subr.mxu0 0.0
    %273 = vmatpush1.msra.mxu0 0.0
    %274 = vmatprep.subr.mxu0 0.0
    %275 = vmatpush1.msra.mxu0 0.0
    %276 = vmatprep.subr.mxu0 0.0
    %277 = vmatpush1.msra.mxu0 0.0
    %278 = vmatprep.mubr.f32.mxu0 0.0
    %279 = vmatmul.mubr.f32.gmra.mrb[0].mxu0 %v28
    %v280 = vpop.f32.mrb[0].mxu0
    %v281 = vadd.f32 %v97, %v280
    %v282 = vpop.f32.mrb[0].mxu0
    %283 = vmatprep.mubr.f32.mxu0 0.0
    %284 = vmatmul.mubr.f32.gmra.mrb[0].mxu0 %v29
    %v285 = vpop.f32.mrb[0].mxu0
    %v286 = vadd.f32 %v97, %v285
    %v287 = vpop.f32.mrb[0].mxu0
    %288 = vmatprep.mubr.f32.mxu0 0.0
    %289 = vmatmul.mubr.f32.gmra.mrb[0].mxu0 %v30
    %v290 = vpop.f32.mrb[0].mxu0
    %v291 = vadd.f32 %v97, %v290
    %v292 = vpop.f32.mrb[0].mxu0
    %293 = vmatprep.mubr.f32.mxu0 0.0
    %294 = vmatmul.mubr.f32.gmra.mrb[0].mxu0 %v31
    %v295 = vpop.f32.mrb[0].mxu0
    %v296 = vadd.f32 %v97, %v295
    %v297 = vpop.f32.mrb[0].mxu0
    %298 = vmatprep.mubr.f32.mxu0 0.0
    %299 = vmatmul.mubr.f32.gmra.mrb[0].mxu0 %v32
    %v300 = vpop.f32.mrb[0].mxu0
    %v301 = vadd.f32 %v97, %v300
    %v302 = vpop.f32.mrb[0].mxu0
    %303 = vmatprep.mubr.f32.mxu0 0.0
    %304 = vmatmul.mubr.f32.gmra.mrb[0].mxu0 %v33
    %v305 = vpop.f32.mrb[0].mxu0
    %v306 = vadd.f32 %v97, %v305
    %v307 = vpop.f32.mrb[0].mxu0
    %308 = vmatprep.mubr.f32.mxu0 0.0
    %309 = vmatmul.mubr.f32.gmra.mrb[0].mxu0 %v34
    %v310 = vpop.f32.mrb[0].mxu0
    %v311 = vadd.f32 %v97, %v310
    %v312 = vpop.f32.mrb[0].mxu0
    %313 = vmatprep.mubr.f32.mxu0 0.0
    %314 = vmatmul.mubr.f32.gmra.mrb[0].mxu0 %v35
    %v315 = vpop.f32.mrb[0].mxu0
    %v316 = vadd.f32 %v97, %v315
    %v317 = vpop.f32.mrb[0].mxu0
    %318 = vdwg.mxu0
    %319 = vst [vmem:[%s3] sm:$0xff] %v168
    %320 = vst [vmem:[%s3 + $0x8] sm:$0xff] %v170
    %321 = vst [vmem:[%s3 + $0x10] sm:$0xff] %v281
    %322 = vst [vmem:[%s3 + $0x18] sm:$0xff] %v174
    %323 = vst [vmem:[%s3 + $0x20] sm:$0xff] %v176
    %324 = vst [vmem:[%s3 + $0x28] sm:$0xff] %v286
    %325 = vst [vmem:[%s3 + $0x30] sm:$0xff] %v180
    %326 = vst [vmem:[%s3 + $0x38] sm:$0xff] %v182
    %327 = vst [vmem:[%s3 + $0x40] sm:$0xff] %v291
    %328 = vst [vmem:[%s3 + $0x48] sm:$0xff] %v186
    %329 = vst [vmem:[%s3 + $0x50] sm:$0xff] %v188
    %330 = vst [vmem:[%s3 + $0x58] sm:$0xff] %v296
    %331 = vst [vmem:[%s3 + $0x60] sm:$0xff] %v192
    %332 = vst [vmem:[%s3 + $0x68] sm:$0xff] %v194
    %333 = vst [vmem:[%s3 + $0x70] sm:$0xff] %v301
    %334 = vst [vmem:[%s3 + $0x78] sm:$0xff] %v198
    %335 = vst [vmem:[%s3 + $0x80] sm:$0xff] %v200
    %336 = vst [vmem:[%s3 + $0x88] sm:$0xff] %v306
    %337 = vst [vmem:[%s3 + $0x90] sm:$0xff] %v204
    %338 = vst [vmem:[%s3 + $0x98] sm:$0xff] %v206
    %339 = vst [vmem:[%s3 + $0xa0] sm:$0xff] %v311
    %340 = vst [vmem:[%s3 + $0xa8] sm:$0xff] %v210
    %341 = vst [vmem:[%s3 + $0xb0] sm:$0xff] %v212
    %342 = vst [vmem:[%s3 + $0xb8] sm:$0xff] %v316
    // Predicated region
    $region18: #{gru_networks_forward.4} parent=1 // pred_check
      _
    $region19: #{gru_networks_forward.4} parent=1 // pred_check_branch
      %344 = sbr.rel (0) target = $region21
    $region20: #{gru_networks_forward.4} parent=1 // pred_region
      _
    $region21: #{gru_networks_forward.4} parent=1 // pred_fallthru
      _
    // Predicated region
    $region22: #{gru_networks_forward.4} parent=1 // pred_check
      _
    $region23: #{gru_networks_forward.4} parent=1 // pred_check_branch
      %346 = sbr.rel (0) target = $region25
    $region24: #{gru_networks_forward.4} parent=1 // pred_region
      _
    $region25: #{gru_networks_forward.4} parent=1 // pred_fallthru
      _
    %347 = vsyncpa [#allocation3], 1

// kernel: gru_networks_forward.5
$region0: #{gru_networks_forward.5}
  #allocation0 [shape = 'u32[]', space=smem, size = 0x4, offset = 0x4, fixed_abs, tag = 'smem constant byte address 0x4 - core index']
  #allocation1 [shape = 'u32[144,128]{1,0:T(1,128)}', space=vmem, size = 0x12000, scoped, tag = 'internal scratch']
  #allocation2 [shape = 'f32[8,128]{1,0:T(8,128)}', space=vmem, size = 0x1000, scoped, tag = 'scratch operand']
  %s0 = inlined_call_operand.vmem [shape: f32[8,8,384], index: 0, kind: input, shape index: {}]
  %s1 = inlined_call_operand.vmem [shape: f32[8,128], index: 1, kind: input, shape index: {}]
  %s2 = inlined_call_operand.vmem [shape: f32[128,384], index: 2, kind: input, shape index: {}]
  %s3 = inlined_call_operand.vmem [shape: f32[1,128], index: 3, kind: input, shape index: {}]
  %s4 = inlined_call_operand.vmem [shape: f32[8,8,128], index: 4, kind: output, shape index: {}]
  %s5 = sld [smem:[#allocation0]]
  $region30: #{gru_networks_forward.5} parent=0
    _
  %s7 = ssub.s32 1, %s5
  %s8 = scalar_select 0, %s7, %s5
  // Predicated region
  $region2: #{gru_networks_forward.5} parent=0 // pred_check
    _
  $region3: #{gru_networks_forward.5} parent=0 // pred_check_branch
    %10 = sbr.rel (0) target = $region5
  $region4: #{gru_networks_forward.5} parent=0 // pred_region
    _
  $region5: #{gru_networks_forward.5} parent=0 // pred_fallthru
    _
  // Predicated region
  $region6: #{gru_networks_forward.5} parent=0 // pred_check
    _
  $region7: #{gru_networks_forward.5} parent=0 // pred_check_branch
    %12 = sbr.rel (0) target = $region9
  $region8: #{gru_networks_forward.5} parent=0 // pred_region
    _
  $region9: #{gru_networks_forward.5} parent=0 // pred_fallthru
    _
  // Predicated region
  $region10: #{gru_networks_forward.5} parent=0 // pred_check
    _
  $region11: #{gru_networks_forward.5} parent=0 // pred_check_branch
    %14 = sbr.rel (0) target = $region13
  $region12: #{gru_networks_forward.5} parent=0 // pred_region
    _
  $region13: #{gru_networks_forward.5} parent=0 // pred_fallthru
    _
  // Predicated region
  $region14: #{gru_networks_forward.5} parent=0 // pred_check
    _
  $region15: #{gru_networks_forward.5} parent=0 // pred_check_branch
    %16 = sbr.rel (0) target = $region17
  $region16: #{gru_networks_forward.5} parent=0 // pred_region
    _
  $region17: #{gru_networks_forward.5} parent=0 // pred_fallthru
    _
  %p17 = scmp.eq.s32.totalorder 0, 0
  // Predicated region
  $region18: #{gru_networks_forward.5} parent=0 // pred_check
    %p18 = pneg %p17
  $region19: #{gru_networks_forward.5} parent=0 // pred_check_branch
    %20 = sbr.rel (%p18) target = $region21
  $region20: #{gru_networks_forward.5} parent=0 // pred_region
    %v21 = vld [vmem:[%s1] sm:$0xff]
    %22 = vst [vmem:[#allocation2] sm:$0xff] %v21
  $region21: #{gru_networks_forward.5} parent=0 // pred_fallthru
    _
  %v23 = vld [vmem:[%s2] sm:$0xff]
  %v24 = vld [vmem:[%s2 + $0x8] sm:$0xff]
  %v25 = vld [vmem:[%s2 + $0x10] sm:$0xff]
  %v26 = vld [vmem:[%s2 + $0x18] sm:$0xff]
  %v27 = vld [vmem:[%s2 + $0x20] sm:$0xff]
  %v28 = vld [vmem:[%s2 + $0x28] sm:$0xff]
  %v29 = vld [vmem:[%s2 + $0x30] sm:$0xff]
  %v30 = vld [vmem:[%s2 + $0x38] sm:$0xff]
  %v31 = vld [vmem:[%s2 + $0x40] sm:$0xff]
  %v32 = vld [vmem:[%s2 + $0x48] sm:$0xff]
  %v33 = vld [vmem:[%s2 + $0x50] sm:$0xff]
  %v34 = vld [vmem:[%s2 + $0x58] sm:$0xff]
  %v35 = vld [vmem:[%s2 + $0x60] sm:$0xff]
  %v36 = vld [vmem:[%s2 + $0x68] sm:$0xff]
  %v37 = vld [vmem:[%s2 + $0x70] sm:$0xff]
  %v38 = vld [vmem:[%s2 + $0x78] sm:$0xff]
  %v39 = vld [vmem:[%s2 + $0x80] sm:$0xff]
  %v40 = vld [vmem:[%s2 + $0x88] sm:$0xff]
  %v41 = vld [vmem:[%s2 + $0x90] sm:$0xff]
  %v42 = vld [vmem:[%s2 + $0x98] sm:$0xff]
  %v43 = vld [vmem:[%s2 + $0xa0] sm:$0xff]
  %v44 = vld [vmem:[%s2 + $0xa8] sm:$0xff]
  %v45 = vld [vmem:[%s2 + $0xb0] sm:$0xff]
  %v46 = vld [vmem:[%s2 + $0xb8] sm:$0xff]
  %v47 = vld [vmem:[%s2 + $0xc0] sm:$0xff]
  %v48 = vld [vmem:[%s2 + $0xc8] sm:$0xff]
  %v49 = vld [vmem:[%s2 + $0xd0] sm:$0xff]
  %v50 = vld [vmem:[%s2 + $0xd8] sm:$0xff]
  %v51 = vld [vmem:[%s2 + $0xe0] sm:$0xff]
  %v52 = vld [vmem:[%s2 + $0xe8] sm:$0xff]
  %v53 = vld [vmem:[%s2 + $0xf0] sm:$0xff]
  %v54 = vld [vmem:[%s2 + $0xf8] sm:$0xff]
  %v55 = vld [vmem:[%s2 + $0x100] sm:$0xff]
  %v56 = vld [vmem:[%s2 + $0x108] sm:$0xff]
  %v57 = vld [vmem:[%s2 + $0x110] sm:$0xff]
  %v58 = vld [vmem:[%s2 + $0x118] sm:$0xff]
  %v59 = vld [vmem:[%s2 + $0x120] sm:$0xff]
  %v60 = vld [vmem:[%s2 + $0x128] sm:$0xff]
  %v61 = vld [vmem:[%s2 + $0x130] sm:$0xff]
  %v62 = vld [vmem:[%s2 + $0x138] sm:$0xff]
  %v63 = vld [vmem:[%s2 + $0x140] sm:$0xff]
  %v64 = vld [vmem:[%s2 + $0x148] sm:$0xff]
  %v65 = vld [vmem:[%s2 + $0x150] sm:$0xff]
  %v66 = vld [vmem:[%s2 + $0x158] sm:$0xff]
  %v67 = vld [vmem:[%s2 + $0x160] sm:$0xff]
  %v68 = vld [vmem:[%s2 + $0x168] sm:$0xff]
  %v69 = vld [vmem:[%s2 + $0x170] sm:$0xff]
  %v70 = vld [vmem:[%s2 + $0x178] sm:$0xff]
  %v71 = vld [vmem:[%s3] sm:$0x1]
  %v73 = vlaneseq
  %v74 = vshrl.u32 %v73, 7
  %v75 = vsub.s32 0, %v74
  %v76 = vrot.slane %v71, %v75
  %v78 = vld [vmem:[#allocation2] sm:$0xff]
  %v79 = vld [vmem:[%s0] sm:$0xff]
  %v80 = vld [vmem:[%s0 + $0x8] sm:$0xff]
  %v81 = vld [vmem:[%s0 + $0x10] sm:$0xff]
  %82 = vmatprep.subr.mxu0 %v24
  %83 = vmatpush1.msra.mxu0 %v23
  %84 = vmatprep.subr.mxu0 %v27
  %85 = vmatpush1.msra.mxu0 %v26
  %86 = vmatprep.subr.mxu0 %v30
  %87 = vmatpush1.msra.mxu0 %v29
  %88 = vmatprep.subr.mxu0 %v33
  %89 = vmatpush1.msra.mxu0 %v32
  %90 = vmatprep.subr.mxu0 %v36
  %91 = vmatpush1.msra.mxu0 %v35
  %92 = vmatprep.subr.mxu0 %v39
  %93 = vmatpush1.msra.mxu0 %v38
  %94 = vmatprep.subr.mxu0 %v42
  %95 = vmatpush1.msra.mxu0 %v41
  %96 = vmatprep.subr.mxu0 %v45
  %97 = vmatpush1.msra.mxu0 %v44
  %98 = vmatprep.subr.mxu0 %v48
  %99 = vmatpush1.msra.mxu0 %v47
  %100 = vmatprep.subr.mxu0 %v51
  %101 = vmatpush1.msra.mxu0 %v50
  %102 = vmatprep.subr.mxu0 %v54
  %103 = vmatpush1.msra.mxu0 %v53
  %104 = vmatprep.subr.mxu0 %v57
  %105 = vmatpush1.msra.mxu0 %v56
  %106 = vmatprep.subr.mxu0 %v60
  %107 = vmatpush1.msra.mxu0 %v59
  %108 = vmatprep.subr.mxu0 %v63
  %109 = vmatpush1.msra.mxu0 %v62
  %110 = vmatprep.subr.mxu0 %v66
  %111 = vmatpush1.msra.mxu0 %v65
  %112 = vmatprep.subr.mxu0 %v69
  %113 = vmatpush1.msra.mxu0 %v68
  %114 = vmatprep.subr.mxu0 0.0
  %115 = vmatpush1.msra.mxu0 0.0
  %116 = vmatprep.subr.mxu0 0.0
  %117 = vmatpush1.msra.mxu0 0.0
  %118 = vmatprep.subr.mxu0 0.0
  %119 = vmatpush1.msra.mxu0 0.0
  %120 = vmatprep.subr.mxu0 0.0
  %121 = vmatpush1.msra.mxu0 0.0
  %122 = vmatprep.subr.mxu0 0.0
  %123 = vmatpush1.msra.mxu0 0.0
  %124 = vmatprep.subr.mxu0 0.0
  %125 = vmatpush1.msra.mxu0 0.0
  %126 = vmatprep.subr.mxu0 0.0
  %127 = vmatpush1.msra.mxu0 0.0
  %128 = vmatprep.subr.mxu0 0.0
  %129 = vmatpush1.msra.mxu0 0.0
  %130 = vmatprep.subr.mxu0 0.0
  %131 = vmatpush1.msra.mxu0 0.0
  %132 = vmatprep.subr.mxu0 0.0
  %133 = vmatpush1.msra.mxu0 0.0
  %134 = vmatprep.subr.mxu0 0.0
  %135 = vmatpush1.msra.mxu0 0.0
  %136 = vmatprep.subr.mxu0 0.0
  %137 = vmatpush1.msra.mxu0 0.0
  %138 = vmatprep.subr.mxu0 0.0
  %139 = vmatpush1.msra.mxu0 0.0
  %140 = vmatprep.subr.mxu0 0.0
  %141 = vmatpush1.msra.mxu0 0.0
  %142 = vmatprep.subr.mxu0 0.0
  %143 = vmatpush1.msra.mxu0 0.0
  %144 = vmatprep.subr.mxu0 0.0
  %145 = vmatpush1.msra.mxu0 0.0
  %146 = vmatprep.mubr.f32.mxu0 0.0
  %147 = vmatmul.mubr.f32.gmra.mrb[0].mxu0 %v78
  %v148 = vpop.f32.mrb[0].mxu0
  %v149 = vadd.f32 0.0, %v148
  %v150 = vpop.f32.mrb[0].mxu0
  %v151 = vadd.f32 0.0, %v150
  %152 = vdwg.mxu0
  %153 = vmatprep.subr.mxu0 0.0
  %154 = vmatpush1.msra.mxu0 %v25
  %155 = vmatprep.subr.mxu0 0.0
  %156 = vmatpush1.msra.mxu0 %v28
  %157 = vmatprep.subr.mxu0 0.0
  %158 = vmatpush1.msra.mxu0 %v31
  %159 = vmatprep.subr.mxu0 0.0
  %160 = vmatpush1.msra.mxu0 %v34
  %161 = vmatprep.subr.mxu0 0.0
  %162 = vmatpush1.msra.mxu0 %v37
  %163 = vmatprep.subr.mxu0 0.0
  %164 = vmatpush1.msra.mxu0 %v40
  %165 = vmatprep.subr.mxu0 0.0
  %166 = vmatpush1.msra.mxu0 %v43
  %167 = vmatprep.subr.mxu0 0.0
  %168 = vmatpush1.msra.mxu0 %v46
  %169 = vmatprep.subr.mxu0 0.0
  %170 = vmatpush1.msra.mxu0 %v49
  %171 = vmatprep.subr.mxu0 0.0
  %172 = vmatpush1.msra.mxu0 %v52
  %173 = vmatprep.subr.mxu0 0.0
  %174 = vmatpush1.msra.mxu0 %v55
  %175 = vmatprep.subr.mxu0 0.0
  %176 = vmatpush1.msra.mxu0 %v58
  %177 = vmatprep.subr.mxu0 0.0
  %178 = vmatpush1.msra.mxu0 %v61
  %179 = vmatprep.subr.mxu0 0.0
  %180 = vmatpush1.msra.mxu0 %v64
  %181 = vmatprep.subr.mxu0 0.0
  %182 = vmatpush1.msra.mxu0 %v67
  %183 = vmatprep.subr.mxu0 0.0
  %184 = vmatpush1.msra.mxu0 %v70
  %185 = vmatprep.subr.mxu0 0.0
  %186 = vmatpush1.msra.mxu0 0.0
  %187 = vmatprep.subr.mxu0 0.0
  %188 = vmatpush1.msra.mxu0 0.0
  %189 = vmatprep.subr.mxu0 0.0
  %190 = vmatpush1.msra.mxu0 0.0
  %191 = vmatprep.subr.mxu0 0.0
  %192 = vmatpush1.msra.mxu0 0.0
  %193 = vmatprep.subr.mxu0 0.0
  %194 = vmatpush1.msra.mxu0 0.0
  %195 = vmatprep.subr.mxu0 0.0
  %196 = vmatpush1.msra.mxu0 0.0
  %197 = vmatprep.subr.mxu0 0.0
  %198 = vmatpush1.msra.mxu0 0.0
  %199 = vmatprep.subr.mxu0 0.0
  %200 = vmatpush1.msra.mxu0 0.0
  %201 = vmatprep.subr.mxu0 0.0
  %202 = vmatpush1.msra.mxu0 0.0
  %203 = vmatprep.subr.mxu0 0.0
  %204 = vmatpush1.msra.mxu0 0.0
  %205 = vmatprep.subr.mxu0 0.0
  %206 = vmatpush1.msra.mxu0 0.0
  %207 = vmatprep.subr.mxu0 0.0
  %208 = vmatpush1.msra.mxu0 0.0
  %209 = vmatprep.subr.mxu0 0.0
  %210 = vmatpush1.msra.mxu0 0.0
  %211 = vmatprep.subr.mxu0 0.0
  %212 = vmatpush1.msra.mxu0 0.0
  %213 = vmatprep.subr.mxu0 0.0
  %214 = vmatpush1.msra.mxu0 0.0
  %215 = vmatprep.subr.mxu0 0.0
  %216 = vmatpush1.msra.mxu0 0.0
  %217 = vmatprep.mubr.f32.mxu0 0.0
  %218 = vmatmul.mubr.f32.gmra.mrb[0].mxu0 %v78
  %v219 = vpop.f32.mrb[0].mxu0
  %v220 = vadd.f32 0.0, %v219
  %v221 = vpop.f32.mrb[0].mxu0
  %222 = vdwg.mxu0
  %v223 = vadd.f32 %v79, %v149
  %v224 = vadd.f32 %v80, %v151
  %v225 = vxor.u32 %v223, 2147483648
  %v226 = vxor.u32 %v224, 2147483648
  %v227 = vmul.f32 %v225, 1.442695
  %v228 = vpow.pop %v227
  %v229 = vmul.f32 %v226, 1.442695
  %v230 = vpow.pop %v229
  %v231 = vadd.f32 %v228, 1.0
  %v232 = vadd.f32 %v230, 1.0
  %v233 = vrcp.pop %v231
  %v234 = vmul.f32 1.0, %v233
  %v235 = vrcp.pop %v232
  %v236 = vmul.f32 1.0, %v235
  %v237 = vadd.f32 %v220, %v76
  %v238 = vmul.f32 %v234, %v237
  %v239 = vadd.f32 %v81, %v238
  %v240 = vtanh.pop %v239
  %v241 = vsub.f32 %v78, %v240
  %v242 = vmul.f32 %v236, %v241
  %v243 = vadd.f32 %v240, %v242
  %244 = vst [vmem:[%s4] sm:$0xff] %v243
  %s245 = scalar_lea.vmem %s0, 24
  %v246 = vld [vmem:[%s245] sm:$0xff]
  %v247 = vld [vmem:[%s245 + $0x8] sm:$0xff]
  %v248 = vld [vmem:[%s245 + $0x10] sm:$0xff]
  %249 = vmatprep.subr.mxu0 %v24
  %250 = vmatpush1.msra.mxu0 %v23
  %251 = vmatprep.subr.mxu0 %v27
  %252 = vmatpush1.msra.mxu0 %v26
  %253 = vmatprep.subr.mxu0 %v30
  %254 = vmatpush1.msra.mxu0 %v29
  %255 = vmatprep.subr.mxu0 %v33
  %256 = vmatpush1.msra.mxu0 %v32
  %257 = vmatprep.subr.mxu0 %v36
  %258 = vmatpush1.msra.mxu0 %v35
  %259 = vmatprep.subr.mxu0 %v39
  %260 = vmatpush1.msra.mxu0 %v38
  %261 = vmatprep.subr.mxu0 %v42
  %262 = vmatpush1.msra.mxu0 %v41
  %263 = vmatprep.subr.mxu0 %v45
  %264 = vmatpush1.msra.mxu0 %v44
  %265 = vmatprep.subr.mxu0 %v48
  %266 = vmatpush1.msra.mxu0 %v47
  %267 = vmatprep.subr.mxu0 %v51
  %268 = vmatpush1.msra.mxu0 %v50
  %269 = vmatprep.subr.mxu0 %v54
  %270 = vmatpush1.msra.mxu0 %v53
  %271 = vmatprep.subr.mxu0 %v57
  %272 = vmatpush1.msra.mxu0 %v56
  %273 = vmatprep.subr.mxu0 %v60
  %274 = vmatpush1.msra.mxu0 %v59
  %275 = vmatprep.subr.mxu0 %v63
  %276 = vmatpush1.msra.mxu0 %v62
  %277 = vmatprep.subr.mxu0 %v66
  %278 = vmatpush1.msra.mxu0 %v65
  %279 = vmatprep.subr.mxu0 %v69
  %280 = vmatpush1.msra.mxu0 %v68
  %281 = vmatprep.subr.mxu0 0.0
  %282 = vmatpush1.msra.mxu0 0.0
  %283 = vmatprep.subr.mxu0 0.0
  %284 = vmatpush1.msra.mxu0 0.0
  %285 = vmatprep.subr.mxu0 0.0
  %286 = vmatpush1.msra.mxu0 0.0
  %287 = vmatprep.subr.mxu0 0.0
  %288 = vmatpush1.msra.mxu0 0.0
  %289 = vmatprep.subr.mxu0 0.0
  %290 = vmatpush1.msra.mxu0 0.0
  %291 = vmatprep.subr.mxu0 0.0
  %292 = vmatpush1.msra.mxu0 0.0
  %293 = vmatprep.subr.mxu0 0.0
  %294 = vmatpush1.msra.mxu0 0.0
  %295 = vmatprep.subr.mxu0 0.0
  %296 = vmatpush1.msra.mxu0 0.0
  %297 = vmatprep.subr.mxu0 0.0
  %298 = vmatpush1.msra.mxu0 0.0
  %299 = vmatprep.subr.mxu0 0.0
  %300 = vmatpush1.msra.mxu0 0.0
  %301 = vmatprep.subr.mxu0 0.0
  %302 = vmatpush1.msra.mxu0 0.0
  %303 = vmatprep.subr.mxu0 0.0
  %304 = vmatpush1.msra.mxu0 0.0
  %305 = vmatprep.subr.mxu0 0.0
  %306 = vmatpush1.msra.mxu0 0.0
  %307 = vmatprep.subr.mxu0 0.0
  %308 = vmatpush1.msra.mxu0 0.0
  %309 = vmatprep.subr.mxu0 0.0
  %310 = vmatpush1.msra.mxu0 0.0
  %311 = vmatprep.subr.mxu0 0.0
  %312 = vmatpush1.msra.mxu0 0.0
  %313 = vmatprep.mubr.f32.mxu0 0.0
  %314 = vmatmul.mubr.f32.gmra.mrb[0].mxu0 %v243
  %v315 = vpop.f32.mrb[0].mxu0
  %v316 = vadd.f32 0.0, %v315
  %v317 = vpop.f32.mrb[0].mxu0
  %v318 = vadd.f32 0.0, %v317
  %319 = vdwg.mxu0
  %320 = vmatprep.subr.mxu0 0.0
  %321 = vmatpush1.msra.mxu0 %v25
  %322 = vmatprep.subr.mxu0 0.0
  %323 = vmatpush1.msra.mxu0 %v28
  %324 = vmatprep.subr.mxu0 0.0
  %325 = vmatpush1.msra.mxu0 %v31
  %326 = vmatprep.subr.mxu0 0.0
  %327 = vmatpush1.msra.mxu0 %v34
  %328 = vmatprep.subr.mxu0 0.0
  %329 = vmatpush1.msra.mxu0 %v37
  %330 = vmatprep.subr.mxu0 0.0
  %331 = vmatpush1.msra.mxu0 %v40
  %332 = vmatprep.subr.mxu0 0.0
  %333 = vmatpush1.msra.mxu0 %v43
  %334 = vmatprep.subr.mxu0 0.0
  %335 = vmatpush1.msra.mxu0 %v46
  %336 = vmatprep.subr.mxu0 0.0
  %337 = vmatpush1.msra.mxu0 %v49
  %338 = vmatprep.subr.mxu0 0.0
  %339 = vmatpush1.msra.mxu0 %v52
  %340 = vmatprep.subr.mxu0 0.0
  %341 = vmatpush1.msra.mxu0 %v55
  %342 = vmatprep.subr.mxu0 0.0
  %343 = vmatpush1.msra.mxu0 %v58
  %344 = vmatprep.subr.mxu0 0.0
  %345 = vmatpush1.msra.mxu0 %v61
  %346 = vmatprep.subr.mxu0 0.0
  %347 = vmatpush1.msra.mxu0 %v64
  %348 = vmatprep.subr.mxu0 0.0
  %349 = vmatpush1.msra.mxu0 %v67
  %350 = vmatprep.subr.mxu0 0.0
  %351 = vmatpush1.msra.mxu0 %v70
  %352 = vmatprep.subr.mxu0 0.0
  %353 = vmatpush1.msra.mxu0 0.0
  %354 = vmatprep.subr.mxu0 0.0
  %355 = vmatpush1.msra.mxu0 0.0
  %356 = vmatprep.subr.mxu0 0.0
  %357 = vmatpush1.msra.mxu0 0.0
  %358 = vmatprep.subr.mxu0 0.0
  %359 = vmatpush1.msra.mxu0 0.0
  %360 = vmatprep.subr.mxu0 0.0
  %361 = vmatpush1.msra.mxu0 0.0
  %362 = vmatprep.subr.mxu0 0.0
  %363 = vmatpush1.msra.mxu0 0.0
  %364 = vmatprep.subr.mxu0 0.0
  %365 = vmatpush1.msra.mxu0 0.0
  %366 = vmatprep.subr.mxu0 0.0
  %367 = vmatpush1.msra.mxu0 0.0
  %368 = vmatprep.subr.mxu0 0.0
  %369 = vmatpush1.msra.mxu0 0.0
  %370 = vmatprep.subr.mxu0 0.0
  %371 = vmatpush1.msra.mxu0 0.0
  %372 = vmatprep.subr.mxu0 0.0
  %373 = vmatpush1.msra.mxu0 0.0
  %374 = vmatprep.subr.mxu0 0.0
  %375 = vmatpush1.msra.mxu0 0.0
  %376 = vmatprep.subr.mxu0 0.0
  %377 = vmatpush1.msra.mxu0 0.0
  %378 = vmatprep.subr.mxu0 0.0
  %379 = vmatpush1.msra.mxu0 0.0
  %380 = vmatprep.subr.mxu0 0.0
  %381 = vmatpush1.msra.mxu0 0.0
  %382 = vmatprep.subr.mxu0 0.0
  %383 = vmatpush1.msra.mxu0 0.0
  %384 = vmatprep.mubr.f32.mxu0 0.0
  %385 = vmatmul.mubr.f32.gmra.mrb[0].mxu0 %v243
  %v386 = vpop.f32.mrb[0].mxu0
  %v387 = vadd.f32 0.0, %v386
  %v388 = vpop.f32.mrb[0].mxu0
  %389 = vdwg.mxu0
  %v390 = vadd.f32 %v246, %v316
  %v391 = vadd.f32 %v247, %v318
  %v392 = vxor.u32 %v390, 2147483648
  %v393 = vxor.u32 %v391, 2147483648
  %v394 = vmul.f32 %v392, 1.442695
  %v395 = vpow.pop %v394
  %v396 = vmul.f32 %v393, 1.442695
  %v397 = vpow.pop %v396
  %v398 = vadd.f32 %v395, 1.0
  %v399 = vadd.f32 %v397, 1.0
  %v400 = vrcp.pop %v398
  %v401 = vmul.f32 1.0, %v400
  %v402 = vrcp.pop %v399
  %v403 = vmul.f32 1.0, %v402
  %v404 = vadd.f32 %v387, %v76
  %v405 = vmul.f32 %v401, %v404
  %v406 = vadd.f32 %v248, %v405
  %v407 = vtanh.pop %v406
  %v408 = vsub.f32 %v243, %v407
  %v409 = vmul.f32 %v403, %v408
  %v410 = vadd.f32 %v407, %v409
  %s411 = scalar_lea.vmem %s4, 8
  %412 = vst [vmem:[%s411] sm:$0xff] %v410
  %s413 = scalar_lea.vmem %s0, 48
  %v414 = vld [vmem:[%s413] sm:$0xff]
  %v415 = vld [vmem:[%s413 + $0x8] sm:$0xff]
  %v416 = vld [vmem:[%s413 + $0x10] sm:$0xff]
  %417 = vmatprep.subr.mxu0 %v24
  %418 = vmatpush1.msra.mxu0 %v23
  %419 = vmatprep.subr.mxu0 %v27
  %420 = vmatpush1.msra.mxu0 %v26
  %421 = vmatprep.subr.mxu0 %v30
  %422 = vmatpush1.msra.mxu0 %v29
  %423 = vmatprep.subr.mxu0 %v33
  %424 = vmatpush1.msra.mxu0 %v32
  %425 = vmatprep.subr.mxu0 %v36
  %426 = vmatpush1.msra.mxu0 %v35
  %427 = vmatprep.subr.mxu0 %v39
  %428 = vmatpush1.msra.mxu0 %v38
  %429 = vmatprep.subr.mxu0 %v42
  %430 = vmatpush1.msra.mxu0 %v41
  %431 = vmatprep.subr.mxu0 %v45
  %432 = vmatpush1.msra.mxu0 %v44
  %433 = vmatprep.subr.mxu0 %v48
  %434 = vmatpush1.msra.mxu0 %v47
  %435 = vmatprep.subr.mxu0 %v51
  %436 = vmatpush1.msra.mxu0 %v50
  %437 = vmatprep.subr.mxu0 %v54
  %438 = vmatpush1.msra.mxu0 %v53
  %439 = vmatprep.subr.mxu0 %v57
  %440 = vmatpush1.msra.mxu0 %v56
  %441 = vmatprep.subr.mxu0 %v60
  %442 = vmatpush1.msra.mxu0 %v59
  %443 = vmatprep.subr.mxu0 %v63
  %444 = vmatpush1.msra.mxu0 %v62
  %445 = vmatprep.subr.mxu0 %v66
  %446 = vmatpush1.msra.mxu0 %v65
  %447 = vmatprep.subr.mxu0 %v69
  %448 = vmatpush1.msra.mxu0 %v68
  %449 = vmatprep.subr.mxu0 0.0
  %450 = vmatpush1.msra.mxu0 0.0
  %451 = vmatprep.subr.mxu0 0.0
  %452 = vmatpush1.msra.mxu0 0.0
  %453 = vmatprep.subr.mxu0 0.0
  %454 = vmatpush1.msra.mxu0 0.0
  %455 = vmatprep.subr.mxu0 0.0
  %456 = vmatpush1.msra.mxu0 0.0
  %457 = vmatprep.subr.mxu0 0.0
  %458 = vmatpush1.msra.mxu0 0.0
  %459 = vmatprep.subr.mxu0 0.0
  %460 = vmatpush1.msra.mxu0 0.0
  %461 = vmatprep.subr.mxu0 0.0
  %462 = vmatpush1.msra.mxu0 0.0
  %463 = vmatprep.subr.mxu0 0.0
  %464 = vmatpush1.msra.mxu0 0.0
  %465 = vmatprep.subr.mxu0 0.0
  %466 = vmatpush1.msra.mxu0 0.0
  %467 = vmatprep.subr.mxu0 0.0
  %468 = vmatpush1.msra.mxu0 0.0
  %469 = vmatprep.subr.mxu0 0.0
  %470 = vmatpush1.msra.mxu0 0.0
  %471 = vmatprep.subr.mxu0 0.0
  %472 = vmatpush1.msra.mxu0 0.0
  %473 = vmatprep.subr.mxu0 0.0
  %474 = vmatpush1.msra.mxu0 0.0
  %475 = vmatprep.subr.mxu0 0.0
  %476 = vmatpush1.msra.mxu0 0.0
  %477 = vmatprep.subr.mxu0 0.0
  %478 = vmatpush1.msra.mxu0 0.0
  %479 = vmatprep.subr.mxu0 0.0
  %480 = vmatpush1.msra.mxu0 0.0
  %481 = vmatprep.mubr.f32.mxu0 0.0
  %482 = vmatmul.mubr.f32.gmra.mrb[0].mxu0 %v410
  %v483 = vpop.f32.mrb[0].mxu0
  %v484 = vadd.f32 0.0, %v483
  %v485 = vpop.f32.mrb[0].mxu0
  %v486 = vadd.f32 0.0, %v485
  %487 = vdwg.mxu0
  %488 = vmatprep.subr.mxu0 0.0
  %489 = vmatpush1.msra.mxu0 %v25
  %490 = vmatprep.subr.mxu0 0.0
  %491 = vmatpush1.msra.mxu0 %v28
  %492 = vmatprep.subr.mxu0 0.0
  %493 = vmatpush1.msra.mxu0 %v31
  %494 = vmatprep.subr.mxu0 0.0
  %495 = vmatpush1.msra.mxu0 %v34
  %496 = vmatprep.subr.mxu0 0.0
  %497 = vmatpush1.msra.mxu0 %v37
  %498 = vmatprep.subr.mxu0 0.0
  %499 = vmatpush1.msra.mxu0 %v40
  %500 = vmatprep.subr.mxu0 0.0
  %501 = vmatpush1.msra.mxu0 %v43
  %502 = vmatprep.subr.mxu0 0.0
  %503 = vmatpush1.msra.mxu0 %v46
  %504 = vmatprep.subr.mxu0 0.0
  %505 = vmatpush1.msra.mxu0 %v49
  %506 = vmatprep.subr.mxu0 0.0
  %507 = vmatpush1.msra.mxu0 %v52
  %508 = vmatprep.subr.mxu0 0.0
  %509 = vmatpush1.msra.mxu0 %v55
  %510 = vmatprep.subr.mxu0 0.0
  %511 = vmatpush1.msra.mxu0 %v58
  %512 = vmatprep.subr.mxu0 0.0
  %513 = vmatpush1.msra.mxu0 %v61
  %514 = vmatprep.subr.mxu0 0.0
  %515 = vmatpush1.msra.mxu0 %v64
  %516 = vmatprep.subr.mxu0 0.0
  %517 = vmatpush1.msra.mxu0 %v67
  %518 = vmatprep.subr.mxu0 0.0
  %519 = vmatpush1.msra.mxu0 %v70
  %520 = vmatprep.subr.mxu0 0.0
  %521 = vmatpush1.msra.mxu0 0.0
  %522 = vmatprep.subr.mxu0 0.0
  %523 = vmatpush1.msra.mxu0 0.0
  %524 = vmatprep.subr.mxu0 0.0
  %525 = vmatpush1.msra.mxu0 0.0
  %526 = vmatprep.subr.mxu0 0.0
  %527 = vmatpush1.msra.mxu0 0.0
  %528 = vmatprep.subr.mxu0 0.0
  %529 = vmatpush1.msra.mxu0 0.0
  %530 = vmatprep.subr.mxu0 0.0
  %531 = vmatpush1.msra.mxu0 0.0
  %532 = vmatprep.subr.mxu0 0.0
  %533 = vmatpush1.msra.mxu0 0.0
  %534 = vmatprep.subr.mxu0 0.0
  %535 = vmatpush1.msra.mxu0 0.0
  %536 = vmatprep.subr.mxu0 0.0
  %537 = vmatpush1.msra.mxu0 0.0
  %538 = vmatprep.subr.mxu0 0.0
  %539 = vmatpush1.msra.mxu0 0.0
  %540 = vmatprep.subr.mxu0 0.0
  %541 = vmatpush1.msra.mxu0 0.0
  %542 = vmatprep.subr.mxu0 0.0
  %543 = vmatpush1.msra.mxu0 0.0
  %544 = vmatprep.subr.mxu0 0.0
  %545 = vmatpush1.msra.mxu0 0.0
  %546 = vmatprep.subr.mxu0 0.0
  %547 = vmatpush1.msra.mxu0 0.0
  %548 = vmatprep.subr.mxu0 0.0
  %549 = vmatpush1.msra.mxu0 0.0
  %550 = vmatprep.subr.mxu0 0.0
  %551 = vmatpush1.msra.mxu0 0.0
  %552 = vmatprep.mubr.f32.mxu0 0.0
  %553 = vmatmul.mubr.f32.gmra.mrb[0].mxu0 %v410
  %v554 = vpop.f32.mrb[0].mxu0
  %v555 = vadd.f32 0.0, %v554
  %v556 = vpop.f32.mrb[0].mxu0
  %557 = vdwg.mxu0
  %v558 = vadd.f32 %v414, %v484
  %v559 = vadd.f32 %v415, %v486
  %v560 = vxor.u32 %v558, 2147483648
  %v561 = vxor.u32 %v559, 2147483648
  %v562 = vmul.f32 %v560, 1.442695
  %v563 = vpow.pop %v562
  %v564 = vmul.f32 %v561, 1.442695
  %v565 = vpow.pop %v564
  %v566 = vadd.f32 %v563, 1.0
  %v567 = vadd.f32 %v565, 1.0
  %v568 = vrcp.pop %v566
  %v569 = vmul.f32 1.0, %v568
  %v570 = vrcp.pop %v567
  %v571 = vmul.f32 1.0, %v570
  %v572 = vadd.f32 %v555, %v76
  %v573 = vmul.f32 %v569, %v572
  %v574 = vadd.f32 %v416, %v573
  %v575 = vtanh.pop %v574
  %v576 = vsub.f32 %v410, %v575
  %v577 = vmul.f32 %v571, %v576
  %v578 = vadd.f32 %v575, %v577
  %s579 = scalar_lea.vmem %s4, 16
  %580 = vst [vmem:[%s579] sm:$0xff] %v578
  %s581 = scalar_lea.vmem %s0, 72
  %v582 = vld [vmem:[%s581] sm:$0xff]
  %v583 = vld [vmem:[%s581 + $0x8] sm:$0xff]
  %v584 = vld [vmem:[%s581 + $0x10] sm:$0xff]
  %585 = vmatprep.subr.mxu0 %v24
  %586 = vmatpush1.msra.mxu0 %v23
  %587 = vmatprep.subr.mxu0 %v27
  %588 = vmatpush1.msra.mxu0 %v26
  %589 = vmatprep.subr.mxu0 %v30
  %590 = vmatpush1.msra.mxu0 %v29
  %591 = vmatprep.subr.mxu0 %v33
  %592 = vmatpush1.msra.mxu0 %v32
  %593 = vmatprep.subr.mxu0 %v36
  %594 = vmatpush1.msra.mxu0 %v35
  %595 = vmatprep.subr.mxu0 %v39
  %596 = vmatpush1.msra.mxu0 %v38
  %597 = vmatprep.subr.mxu0 %v42
  %598 = vmatpush1.msra.mxu0 %v41
  %599 = vmatprep.subr.mxu0 %v45
  %600 = vmatpush1.msra.mxu0 %v44
  %601 = vmatprep.subr.mxu0 %v48
  %602 = vmatpush1.msra.mxu0 %v47
  %603 = vmatprep.subr.mxu0 %v51
  %604 = vmatpush1.msra.mxu0 %v50
  %605 = vmatprep.subr.mxu0 %v54
  %606 = vmatpush1.msra.mxu0 %v53
  %607 = vmatprep.subr.mxu0 %v57
  %608 = vmatpush1.msra.mxu0 %v56
  %609 = vmatprep.subr.mxu0 %v60
  %610 = vmatpush1.msra.mxu0 %v59
  %611 = vmatprep.subr.mxu0 %v63
  %612 = vmatpush1.msra.mxu0 %v62
  %613 = vmatprep.subr.mxu0 %v66
  %614 = vmatpush1.msra.mxu0 %v65
  %615 = vmatprep.subr.mxu0 %v69
  %616 = vmatpush1.msra.mxu0 %v68
  %617 = vmatprep.subr.mxu0 0.0
  %618 = vmatpush1.msra.mxu0 0.0
  %619 = vmatprep.subr.mxu0 0.0
  %620 = vmatpush1.msra.mxu0 0.0
  %621 = vmatprep.subr.mxu0 0.0
  %622 = vmatpush1.msra.mxu0 0.0
  %623 = vmatprep.subr.mxu0 0.0
  %624 = vmatpush1.msra.mxu0 0.0
  %625 = vmatprep.subr.mxu0 0.0
  %626 = vmatpush1.msra.mxu0 0.0
  %627 = vmatprep.subr.mxu0 0.0
  %628 = vmatpush1.msra.mxu0 0.0
  %629 = vmatprep.subr.mxu0 0.0
  %630 = vmatpush1.msra.mxu0 0.0
  %631 = vmatprep.subr.mxu0 0.0
  %632 = vmatpush1.msra.mxu0 0.0
  %633 = vmatprep.subr.mxu0 0.0
  %634 = vmatpush1.msra.mxu0 0.0
  %635 = vmatprep.subr.mxu0 0.0
  %636 = vmatpush1.msra.mxu0 0.0
  %637 = vmatprep.subr.mxu0 0.0
  %638 = vmatpush1.msra.mxu0 0.0
  %639 = vmatprep.subr.mxu0 0.0
  %640 = vmatpush1.msra.mxu0 0.0
  %641 = vmatprep.subr.mxu0 0.0
  %642 = vmatpush1.msra.mxu0 0.0
  %643 = vmatprep.subr.mxu0 0.0
  %644 = vmatpush1.msra.mxu0 0.0
  %645 = vmatprep.subr.mxu0 0.0
  %646 = vmatpush1.msra.mxu0 0.0
  %647 = vmatprep.subr.mxu0 0.0
  %648 = vmatpush1.msra.mxu0 0.0
  %649 = vmatprep.mubr.f32.mxu0 0.0
  %650 = vmatmul.mubr.f32.gmra.mrb[0].mxu0 %v578
  %v651 = vpop.f32.mrb[0].mxu0
  %v652 = vadd.f32 0.0, %v651
  %v653 = vpop.f32.mrb[0].mxu0
  %v654 = vadd.f32 0.0, %v653
  %655 = vdwg.mxu0
  %656 = vmatprep.subr.mxu0 0.0
  %657 = vmatpush1.msra.mxu0 %v25
  %658 = vmatprep.subr.mxu0 0.0
  %659 = vmatpush1.msra.mxu0 %v28
  %660 = vmatprep.subr.mxu0 0.0
  %661 = vmatpush1.msra.mxu0 %v31
  %662 = vmatprep.subr.mxu0 0.0
  %663 = vmatpush1.msra.mxu0 %v34
  %664 = vmatprep.subr.mxu0 0.0
  %665 = vmatpush1.msra.mxu0 %v37
  %666 = vmatprep.subr.mxu0 0.0
  %667 = vmatpush1.msra.mxu0 %v40
  %668 = vmatprep.subr.mxu0 0.0
  %669 = vmatpush1.msra.mxu0 %v43
  %670 = vmatprep.subr.mxu0 0.0
  %671 = vmatpush1.msra.mxu0 %v46
  %672 = vmatprep.subr.mxu0 0.0
  %673 = vmatpush1.msra.mxu0 %v49
  %674 = vmatprep.subr.mxu0 0.0
  %675 = vmatpush1.msra.mxu0 %v52
  %676 = vmatprep.subr.mxu0 0.0
  %677 = vmatpush1.msra.mxu0 %v55
  %678 = vmatprep.subr.mxu0 0.0
  %679 = vmatpush1.msra.mxu0 %v58
  %680 = vmatprep.subr.mxu0 0.0
  %681 = vmatpush1.msra.mxu0 %v61
  %682 = vmatprep.subr.mxu0 0.0
  %683 = vmatpush1.msra.mxu0 %v64
  %684 = vmatprep.subr.mxu0 0.0
  %685 = vmatpush1.msra.mxu0 %v67
  %686 = vmatprep.subr.mxu0 0.0
  %687 = vmatpush1.msra.mxu0 %v70
  %688 = vmatprep.subr.mxu0 0.0
  %689 = vmatpush1.msra.mxu0 0.0
  %690 = vmatprep.subr.mxu0 0.0
  %691 = vmatpush1.msra.mxu0 0.0
  %692 = vmatprep.subr.mxu0 0.0
  %693 = vmatpush1.msra.mxu0 0.0
  %694 = vmatprep.subr.mxu0 0.0
  %695 = vmatpush1.msra.mxu0 0.0
  %696 = vmatprep.subr.mxu0 0.0
  %697 = vmatpush1.msra.mxu0 0.0
  %698 = vmatprep.subr.mxu0 0.0
  %699 = vmatpush1.msra.mxu0 0.0
  %700 = vmatprep.subr.mxu0 0.0
  %701 = vmatpush1.msra.mxu0 0.0
  %702 = vmatprep.subr.mxu0 0.0
  %703 = vmatpush1.msra.mxu0 0.0
  %704 = vmatprep.subr.mxu0 0.0
  %705 = vmatpush1.msra.mxu0 0.0
  %706 = vmatprep.subr.mxu0 0.0
  %707 = vmatpush1.msra.mxu0 0.0
  %708 = vmatprep.subr.mxu0 0.0
  %709 = vmatpush1.msra.mxu0 0.0
  %710 = vmatprep.subr.mxu0 0.0
  %711 = vmatpush1.msra.mxu0 0.0
  %712 = vmatprep.subr.mxu0 0.0
  %713 = vmatpush1.msra.mxu0 0.0
  %714 = vmatprep.subr.mxu0 0.0
  %715 = vmatpush1.msra.mxu0 0.0
  %716 = vmatprep.subr.mxu0 0.0
  %717 = vmatpush1.msra.mxu0 0.0
  %718 = vmatprep.subr.mxu0 0.0
  %719 = vmatpush1.msra.mxu0 0.0
  %720 = vmatprep.mubr.f32.mxu0 0.0
  %721 = vmatmul.mubr.f32.gmra.mrb[0].mxu0 %v578
  %v722 = vpop.f32.mrb[0].mxu0
  %v723 = vadd.f32 0.0, %v722
  %v724 = vpop.f32.mrb[0].mxu0
  %725 = vdwg.mxu0
  %v726 = vadd.f32 %v582, %v652
  %v727 = vadd.f32 %v583, %v654
  %v728 = vxor.u32 %v726, 2147483648
  %v729 = vxor.u32 %v727, 2147483648
  %v730 = vmul.f32 %v728, 1.442695
  %v731 = vpow.pop %v730
  %v732 = vmul.f32 %v729, 1.442695
  %v733 = vpow.pop %v732
  %v734 = vadd.f32 %v731, 1.0
  %v735 = vadd.f32 %v733, 1.0
  %v736 = vrcp.pop %v734
  %v737 = vmul.f32 1.0, %v736
  %v738 = vrcp.pop %v735
  %v739 = vmul.f32 1.0, %v738
  %v740 = vadd.f32 %v723, %v76
  %v741 = vmul.f32 %v737, %v740
  %v742 = vadd.f32 %v584, %v741
  %v743 = vtanh.pop %v742
  %v744 = vsub.f32 %v578, %v743
  %v745 = vmul.f32 %v739, %v744
  %v746 = vadd.f32 %v743, %v745
  %s747 = scalar_lea.vmem %s4, 24
  %748 = vst [vmem:[%s747] sm:$0xff] %v746
  %s749 = scalar_lea.vmem %s0, 96
  %v750 = vld [vmem:[%s749] sm:$0xff]
  %v751 = vld [vmem:[%s749 + $0x8] sm:$0xff]
  %v752 = vld [vmem:[%s749 + $0x10] sm:$0xff]
  %753 = vmatprep.subr.mxu0 %v24
  %754 = vmatpush1.msra.mxu0 %v23
  %755 = vmatprep.subr.mxu0 %v27
  %756 = vmatpush1.msra.mxu0 %v26
  %757 = vmatprep.subr.mxu0 %v30
  %758 = vmatpush1.msra.mxu0 %v29
  %759 = vmatprep.subr.mxu0 %v33
  %760 = vmatpush1.msra.mxu0 %v32
  %761 = vmatprep.subr.mxu0 %v36
  %762 = vmatpush1.msra.mxu0 %v35
  %763 = vmatprep.subr.mxu0 %v39
  %764 = vmatpush1.msra.mxu0 %v38
  %765 = vmatprep.subr.mxu0 %v42
  %766 = vmatpush1.msra.mxu0 %v41
  %767 = vmatprep.subr.mxu0 %v45
  %768 = vmatpush1.msra.mxu0 %v44
  %769 = vmatprep.subr.mxu0 %v48
  %770 = vmatpush1.msra.mxu0 %v47
  %771 = vmatprep.subr.mxu0 %v51
  %772 = vmatpush1.msra.mxu0 %v50
  %773 = vmatprep.subr.mxu0 %v54
  %774 = vmatpush1.msra.mxu0 %v53
  %775 = vmatprep.subr.mxu0 %v57
  %776 = vmatpush1.msra.mxu0 %v56
  %777 = vmatprep.subr.mxu0 %v60
  %778 = vmatpush1.msra.mxu0 %v59
  %779 = vmatprep.subr.mxu0 %v63
  %780 = vmatpush1.msra.mxu0 %v62
  %781 = vmatprep.subr.mxu0 %v66
  %782 = vmatpush1.msra.mxu0 %v65
  %783 = vmatprep.subr.mxu0 %v69
  %784 = vmatpush1.msra.mxu0 %v68
  %785 = vmatprep.subr.mxu0 0.0
  %786 = vmatpush1.msra.mxu0 0.0
  %787 = vmatprep.subr.mxu0 0.0
  %788 = vmatpush1.msra.mxu0 0.0
  %789 = vmatprep.subr.mxu0 0.0
  %790 = vmatpush1.msra.mxu0 0.0
  %791 = vmatprep.subr.mxu0 0.0
  %792 = vmatpush1.msra.mxu0 0.0
  %793 = vmatprep.subr.mxu0 0.0
  %794 = vmatpush1.msra.mxu0 0.0
  %795 = vmatprep.subr.mxu0 0.0
  %796 = vmatpush1.msra.mxu0 0.0
  %797 = vmatprep.subr.mxu0 0.0
  %798 = vmatpush1.msra.mxu0 0.0
  %799 = vmatprep.subr.mxu0 0.0
  %800 = vmatpush1.msra.mxu0 0.0
  %801 = vmatprep.subr.mxu0 0.0
  %802 = vmatpush1.msra.mxu0 0.0
  %803 = vmatprep.subr.mxu0 0.0
  %804 = vmatpush1.msra.mxu0 0.0
  %805 = vmatprep.subr.mxu0 0.0
  %806 = vmatpush1.msra.mxu0 0.0
  %807 = vmatprep.subr.mxu0 0.0
  %808 = vmatpush1.msra.mxu0 0.0
  %809 = vmatprep.subr.mxu0 0.0
  %810 = vmatpush1.msra.mxu0 0.0
  %811 = vmatprep.subr.mxu0 0.0
  %812 = vmatpush1.msra.mxu0 0.0
  %813 = vmatprep.subr.mxu0 0.0
  %814 = vmatpush1.msra.mxu0 0.0
  %815 = vmatprep.subr.mxu0 0.0
  %816 = vmatpush1.msra.mxu0 0.0
  %817 = vmatprep.mubr.f32.mxu0 0.0
  %818 = vmatmul.mubr.f32.gmra.mrb[0].mxu0 %v746
  %v819 = vpop.f32.mrb[0].mxu0
  %v820 = vadd.f32 0.0, %v819
  %v821 = vpop.f32.mrb[0].mxu0
  %v822 = vadd.f32 0.0, %v821
  %823 = vdwg.mxu0
  %824 = vmatprep.subr.mxu0 0.0
  %825 = vmatpush1.msra.mxu0 %v25
  %826 = vmatprep.subr.mxu0 0.0
  %827 = vmatpush1.msra.mxu0 %v28
  %828 = vmatprep.subr.mxu0 0.0
  %829 = vmatpush1.msra.mxu0 %v31
  %830 = vmatprep.subr.mxu0 0.0
  %831 = vmatpush1.msra.mxu0 %v34
  %832 = vmatprep.subr.mxu0 0.0
  %833 = vmatpush1.msra.mxu0 %v37
  %834 = vmatprep.subr.mxu0 0.0
  %835 = vmatpush1.msra.mxu0 %v40
  %836 = vmatprep.subr.mxu0 0.0
  %837 = vmatpush1.msra.mxu0 %v43
  %838 = vmatprep.subr.mxu0 0.0
  %839 = vmatpush1.msra.mxu0 %v46
  %840 = vmatprep.subr.mxu0 0.0
  %841 = vmatpush1.msra.mxu0 %v49
  %842 = vmatprep.subr.mxu0 0.0
  %843 = vmatpush1.msra.mxu0 %v52
  %844 = vmatprep.subr.mxu0 0.0
  %845 = vmatpush1.msra.mxu0 %v55
  %846 = vmatprep.subr.mxu0 0.0
  %847 = vmatpush1.msra.mxu0 %v58
  %848 = vmatprep.subr.mxu0 0.0
  %849 = vmatpush1.msra.mxu0 %v61
  %850 = vmatprep.subr.mxu0 0.0
  %851 = vmatpush1.msra.mxu0 %v64
  %852 = vmatprep.subr.mxu0 0.0
  %853 = vmatpush1.msra.mxu0 %v67
  %854 = vmatprep.subr.mxu0 0.0
  %855 = vmatpush1.msra.mxu0 %v70
  %856 = vmatprep.subr.mxu0 0.0
  %857 = vmatpush1.msra.mxu0 0.0
  %858 = vmatprep.subr.mxu0 0.0
  %859 = vmatpush1.msra.mxu0 0.0
  %860 = vmatprep.subr.mxu0 0.0
  %861 = vmatpush1.msra.mxu0 0.0
  %862 = vmatprep.subr.mxu0 0.0
  %863 = vmatpush1.msra.mxu0 0.0
  %864 = vmatprep.subr.mxu0 0.0
  %865 = vmatpush1.msra.mxu0 0.0
  %866 = vmatprep.subr.mxu0 0.0
  %867 = vmatpush1.msra.mxu0 0.0
  %868 = vmatprep.subr.mxu0 0.0
  %869 = vmatpush1.msra.mxu0 0.0
  %870 = vmatprep.subr.mxu0 0.0
  %871 = vmatpush1.msra.mxu0 0.0
  %872 = vmatprep.subr.mxu0 0.0
  %873 = vmatpush1.msra.mxu0 0.0
  %874 = vmatprep.subr.mxu0 0.0
  %875 = vmatpush1.msra.mxu0 0.0
  %876 = vmatprep.subr.mxu0 0.0
  %877 = vmatpush1.msra.mxu0 0.0
  %878 = vmatprep.subr.mxu0 0.0
  %879 = vmatpush1.msra.mxu0 0.0
  %880 = vmatprep.subr.mxu0 0.0
  %881 = vmatpush1.msra.mxu0 0.0
  %882 = vmatprep.subr.mxu0 0.0
  %883 = vmatpush1.msra.mxu0 0.0
  %884 = vmatprep.subr.mxu0 0.0
  %885 = vmatpush1.msra.mxu0 0.0
  %886 = vmatprep.subr.mxu0 0.0
  %887 = vmatpush1.msra.mxu0 0.0
  %888 = vmatprep.mubr.f32.mxu0 0.0
  %889 = vmatmul.mubr.f32.gmra.mrb[0].mxu0 %v746
  %v890 = vpop.f32.mrb[0].mxu0
  %v891 = vadd.f32 0.0, %v890
  %v892 = vpop.f32.mrb[0].mxu0
  %893 = vdwg.mxu0
  %v894 = vadd.f32 %v750, %v820
  %v895 = vadd.f32 %v751, %v822
  %v896 = vxor.u32 %v894, 2147483648
  %v897 = vxor.u32 %v895, 2147483648
  %v898 = vmul.f32 %v896, 1.442695
  %v899 = vpow.pop %v898
  %v900 = vmul.f32 %v897, 1.442695
  %v901 = vpow.pop %v900
  %v902 = vadd.f32 %v899, 1.0
  %v903 = vadd.f32 %v901, 1.0
  %v904 = vrcp.pop %v902
  %v905 = vmul.f32 1.0, %v904
  %v906 = vrcp.pop %v903
  %v907 = vmul.f32 1.0, %v906
  %v908 = vadd.f32 %v891, %v76
  %v909 = vmul.f32 %v905, %v908
  %v910 = vadd.f32 %v752, %v909
  %v911 = vtanh.pop %v910
  %v912 = vsub.f32 %v746, %v911
  %v913 = vmul.f32 %v907, %v912
  %v914 = vadd.f32 %v911, %v913
  %s915 = scalar_lea.vmem %s4, 32
  %916 = vst [vmem:[%s915] sm:$0xff] %v914
  %s917 = scalar_lea.vmem %s0, 120
  %v918 = vld [vmem:[%s917] sm:$0xff]
  %v919 = vld [vmem:[%s917 + $0x8] sm:$0xff]
  %v920 = vld [vmem:[%s917 + $0x10] sm:$0xff]
  %921 = vmatprep.subr.mxu0 %v24
  %922 = vmatpush1.msra.mxu0 %v23
  %923 = vmatprep.subr.mxu0 %v27
  %924 = vmatpush1.msra.mxu0 %v26
  %925 = vmatprep.subr.mxu0 %v30
  %926 = vmatpush1.msra.mxu0 %v29
  %927 = vmatprep.subr.mxu0 %v33
  %928 = vmatpush1.msra.mxu0 %v32
  %929 = vmatprep.subr.mxu0 %v36
  %930 = vmatpush1.msra.mxu0 %v35
  %931 = vmatprep.subr.mxu0 %v39
  %932 = vmatpush1.msra.mxu0 %v38
  %933 = vmatprep.subr.mxu0 %v42
  %934 = vmatpush1.msra.mxu0 %v41
  %935 = vmatprep.subr.mxu0 %v45
  %936 = vmatpush1.msra.mxu0 %v44
  %937 = vmatprep.subr.mxu0 %v48
  %938 = vmatpush1.msra.mxu0 %v47
  %939 = vmatprep.subr.mxu0 %v51
  %940 = vmatpush1.msra.mxu0 %v50
  %941 = vmatprep.subr.mxu0 %v54
  %942 = vmatpush1.msra.mxu0 %v53
  %943 = vmatprep.subr.mxu0 %v57
  %944 = vmatpush1.msra.mxu0 %v56
  %945 = vmatprep.subr.mxu0 %v60
  %946 = vmatpush1.msra.mxu0 %v59
  %947 = vmatprep.subr.mxu0 %v63
  %948 = vmatpush1.msra.mxu0 %v62
  %949 = vmatprep.subr.mxu0 %v66
  %950 = vmatpush1.msra.mxu0 %v65
  %951 = vmatprep.subr.mxu0 %v69
  %952 = vmatpush1.msra.mxu0 %v68
  %953 = vmatprep.subr.mxu0 0.0
  %954 = vmatpush1.msra.mxu0 0.0
  %955 = vmatprep.subr.mxu0 0.0
  %956 = vmatpush1.msra.mxu0 0.0
  %957 = vmatprep.subr.mxu0 0.0
  %958 = vmatpush1.msra.mxu0 0.0
  %959 = vmatprep.subr.mxu0 0.0
  %960 = vmatpush1.msra.mxu0 0.0
  %961 = vmatprep.subr.mxu0 0.0
  %962 = vmatpush1.msra.mxu0 0.0
  %963 = vmatprep.subr.mxu0 0.0
  %964 = vmatpush1.msra.mxu0 0.0
  %965 = vmatprep.subr.mxu0 0.0
  %966 = vmatpush1.msra.mxu0 0.0
  %967 = vmatprep.subr.mxu0 0.0
  %968 = vmatpush1.msra.mxu0 0.0
  %969 = vmatprep.subr.mxu0 0.0
  %970 = vmatpush1.msra.mxu0 0.0
  %971 = vmatprep.subr.mxu0 0.0
  %972 = vmatpush1.msra.mxu0 0.0
  %973 = vmatprep.subr.mxu0 0.0
  %974 = vmatpush1.msra.mxu0 0.0
  %975 = vmatprep.subr.mxu0 0.0
  %976 = vmatpush1.msra.mxu0 0.0
  %977 = vmatprep.subr.mxu0 0.0
  %978 = vmatpush1.msra.mxu0 0.0
  %979 = vmatprep.subr.mxu0 0.0
  %980 = vmatpush1.msra.mxu0 0.0
  %981 = vmatprep.subr.mxu0 0.0
  %982 = vmatpush1.msra.mxu0 0.0
  %983 = vmatprep.subr.mxu0 0.0
  %984 = vmatpush1.msra.mxu0 0.0
  %985 = vmatprep.mubr.f32.mxu0 0.0
  %986 = vmatmul.mubr.f32.gmra.mrb[0].mxu0 %v914
  %v987 = vpop.f32.mrb[0].mxu0
  %v988 = vadd.f32 0.0, %v987
  %v989 = vpop.f32.mrb[0].mxu0
  %v990 = vadd.f32 0.0, %v989
  %991 = vdwg.mxu0
  %992 = vmatprep.subr.mxu0 0.0
  %993 = vmatpush1.msra.mxu0 %v25
  %994 = vmatprep.subr.mxu0 0.0
  %995 = vmatpush1.msra.mxu0 %v28
  %996 = vmatprep.subr.mxu0 0.0
  %997 = vmatpush1.msra.mxu0 %v31
  %998 = vmatprep.subr.mxu0 0.0
  %999 = vmatpush1.msra.mxu0 %v34
  %1000 = vmatprep.subr.mxu0 0.0
  %1001 = vmatpush1.msra.mxu0 %v37
  %1002 = vmatprep.subr.mxu0 0.0
  %1003 = vmatpush1.msra.mxu0 %v40
  %1004 = vmatprep.subr.mxu0 0.0
  %1005 = vmatpush1.msra.mxu0 %v43
  %1006 = vmatprep.subr.mxu0 0.0
  %1007 = vmatpush1.msra.mxu0 %v46
  %1008 = vmatprep.subr.mxu0 0.0
  %1009 = vmatpush1.msra.mxu0 %v49
  %1010 = vmatprep.subr.mxu0 0.0
  %1011 = vmatpush1.msra.mxu0 %v52
  %1012 = vmatprep.subr.mxu0 0.0
  %1013 = vmatpush1.msra.mxu0 %v55
  %1014 = vmatprep.subr.mxu0 0.0
  %1015 = vmatpush1.msra.mxu0 %v58
  %1016 = vmatprep.subr.mxu0 0.0
  %1017 = vmatpush1.msra.mxu0 %v61
  %1018 = vmatprep.subr.mxu0 0.0
  %1019 = vmatpush1.msra.mxu0 %v64
  %1020 = vmatprep.subr.mxu0 0.0
  %1021 = vmatpush1.msra.mxu0 %v67
  %1022 = vmatprep.subr.mxu0 0.0
  %1023 = vmatpush1.msra.mxu0 %v70
  %1024 = vmatprep.subr.mxu0 0.0
  %1025 = vmatpush1.msra.mxu0 0.0
  %1026 = vmatprep.subr.mxu0 0.0
  %1027 = vmatpush1.msra.mxu0 0.0
  %1028 = vmatprep.subr.mxu0 0.0
  %1029 = vmatpush1.msra.mxu0 0.0
  %1030 = vmatprep.subr.mxu0 0.0
  %1031 = vmatpush1.msra.mxu0 0.0
  %1032 = vmatprep.subr.mxu0 0.0
  %1033 = vmatpush1.msra.mxu0 0.0
  %1034 = vmatprep.subr.mxu0 0.0
  %1035 = vmatpush1.msra.mxu0 0.0
  %1036 = vmatprep.subr.mxu0 0.0
  %1037 = vmatpush1.msra.mxu0 0.0
  %1038 = vmatprep.subr.mxu0 0.0
  %1039 = vmatpush1.msra.mxu0 0.0
  %1040 = vmatprep.subr.mxu0 0.0
  %1041 = vmatpush1.msra.mxu0 0.0
  %1042 = vmatprep.subr.mxu0 0.0
  %1043 = vmatpush1.msra.mxu0 0.0
  %1044 = vmatprep.subr.mxu0 0.0
  %1045 = vmatpush1.msra.mxu0 0.0
  %1046 = vmatprep.subr.mxu0 0.0
  %1047 = vmatpush1.msra.mxu0 0.0
  %1048 = vmatprep.subr.mxu0 0.0
  %1049 = vmatpush1.msra.mxu0 0.0
  %1050 = vmatprep.subr.mxu0 0.0
  %1051 = vmatpush1.msra.mxu0 0.0
  %1052 = vmatprep.subr.mxu0 0.0
  %1053 = vmatpush1.msra.mxu0 0.0
  %1054 = vmatprep.subr.mxu0 0.0
  %1055 = vmatpush1.msra.mxu0 0.0
  %1056 = vmatprep.mubr.f32.mxu0 0.0
  %1057 = vmatmul.mubr.f32.gmra.mrb[0].mxu0 %v914
  %v1058 = vpop.f32.mrb[0].mxu0
  %v1059 = vadd.f32 0.0, %v1058
  %v1060 = vpop.f32.mrb[0].mxu0
  %1061 = vdwg.mxu0
  %v1062 = vadd.f32 %v918, %v988
  %v1063 = vadd.f32 %v919, %v990
  %v1064 = vxor.u32 %v1062, 2147483648
  %v1065 = vxor.u32 %v1063, 2147483648
  %v1066 = vmul.f32 %v1064, 1.442695
  %v1067 = vpow.pop %v1066
  %v1068 = vmul.f32 %v1065, 1.442695
  %v1069 = vpow.pop %v1068
  %v1070 = vadd.f32 %v1067, 1.0
  %v1071 = vadd.f32 %v1069, 1.0
  %v1072 = vrcp.pop %v1070
  %v1073 = vmul.f32 1.0, %v1072
  %v1074 = vrcp.pop %v1071
  %v1075 = vmul.f32 1.0, %v1074
  %v1076 = vadd.f32 %v1059, %v76
  %v1077 = vmul.f32 %v1073, %v1076
  %v1078 = vadd.f32 %v920, %v1077
  %v1079 = vtanh.pop %v1078
  %v1080 = vsub.f32 %v914, %v1079
  %v1081 = vmul.f32 %v1075, %v1080
  %v1082 = vadd.f32 %v1079, %v1081
  %s1083 = scalar_lea.vmem %s4, 40
  %1084 = vst [vmem:[%s1083] sm:$0xff] %v1082
  %s1085 = scalar_lea.vmem %s0, 144
  %v1086 = vld [vmem:[%s1085] sm:$0xff]
  %v1087 = vld [vmem:[%s1085 + $0x8] sm:$0xff]
  %v1088 = vld [vmem:[%s1085 + $0x10] sm:$0xff]
  %1089 = vmatprep.subr.mxu0 %v24
  %1090 = vmatpush1.msra.mxu0 %v23
  %1091 = vmatprep.subr.mxu0 %v27
  %1092 = vmatpush1.msra.mxu0 %v26
  %1093 = vmatprep.subr.mxu0 %v30
  %1094 = vmatpush1.msra.mxu0 %v29
  %1095 = vmatprep.subr.mxu0 %v33
  %1096 = vmatpush1.msra.mxu0 %v32
  %1097 = vmatprep.subr.mxu0 %v36
  %1098 = vmatpush1.msra.mxu0 %v35
  %1099 = vmatprep.subr.mxu0 %v39
  %1100 = vmatpush1.msra.mxu0 %v38
  %1101 = vmatprep.subr.mxu0 %v42
  %1102 = vmatpush1.msra.mxu0 %v41
  %1103 = vmatprep.subr.mxu0 %v45
  %1104 = vmatpush1.msra.mxu0 %v44
  %1105 = vmatprep.subr.mxu0 %v48
  %1106 = vmatpush1.msra.mxu0 %v47
  %1107 = vmatprep.subr.mxu0 %v51
  %1108 = vmatpush1.msra.mxu0 %v50
  %1109 = vmatprep.subr.mxu0 %v54
  %1110 = vmatpush1.msra.mxu0 %v53
  %1111 = vmatprep.subr.mxu0 %v57
  %1112 = vmatpush1.msra.mxu0 %v56
  %1113 = vmatprep.subr.mxu0 %v60
  %1114 = vmatpush1.msra.mxu0 %v59
  %1115 = vmatprep.subr.mxu0 %v63
  %1116 = vmatpush1.msra.mxu0 %v62
  %1117 = vmatprep.subr.mxu0 %v66
  %1118 = vmatpush1.msra.mxu0 %v65
  %1119 = vmatprep.subr.mxu0 %v69
  %1120 = vmatpush1.msra.mxu0 %v68
  %1121 = vmatprep.subr.mxu0 0.0
  %1122 = vmatpush1.msra.mxu0 0.0
  %1123 = vmatprep.subr.mxu0 0.0
  %1124 = vmatpush1.msra.mxu0 0.0
  %1125 = vmatprep.subr.mxu0 0.0
  %1126 = vmatpush1.msra.mxu0 0.0
  %1127 = vmatprep.subr.mxu0 0.0
  %1128 = vmatpush1.msra.mxu0 0.0
  %1129 = vmatprep.subr.mxu0 0.0
  %1130 = vmatpush1.msra.mxu0 0.0
  %1131 = vmatprep.subr.mxu0 0.0
  %1132 = vmatpush1.msra.mxu0 0.0
  %1133 = vmatprep.subr.mxu0 0.0
  %1134 = vmatpush1.msra.mxu0 0.0
  %1135 = vmatprep.subr.mxu0 0.0
  %1136 = vmatpush1.msra.mxu0 0.0
  %1137 = vmatprep.subr.mxu0 0.0
  %1138 = vmatpush1.msra.mxu0 0.0
  %1139 = vmatprep.subr.mxu0 0.0
  %1140 = vmatpush1.msra.mxu0 0.0
  %1141 = vmatprep.subr.mxu0 0.0
  %1142 = vmatpush1.msra.mxu0 0.0
  %1143 = vmatprep.subr.mxu0 0.0
  %1144 = vmatpush1.msra.mxu0 0.0
  %1145 = vmatprep.subr.mxu0 0.0
  %1146 = vmatpush1.msra.mxu0 0.0
  %1147 = vmatprep.subr.mxu0 0.0
  %1148 = vmatpush1.msra.mxu0 0.0
  %1149 = vmatprep.subr.mxu0 0.0
  %1150 = vmatpush1.msra.mxu0 0.0
  %1151 = vmatprep.subr.mxu0 0.0
  %1152 = vmatpush1.msra.mxu0 0.0
  %1153 = vmatprep.mubr.f32.mxu0 0.0
  %1154 = vmatmul.mubr.f32.gmra.mrb[0].mxu0 %v1082
  %v1155 = vpop.f32.mrb[0].mxu0
  %v1156 = vadd.f32 0.0, %v1155
  %v1157 = vpop.f32.mrb[0].mxu0
  %v1158 = vadd.f32 0.0, %v1157
  %1159 = vdwg.mxu0
  %1160 = vmatprep.subr.mxu0 0.0
  %1161 = vmatpush1.msra.mxu0 %v25
  %1162 = vmatprep.subr.mxu0 0.0
  %1163 = vmatpush1.msra.mxu0 %v28
  %1164 = vmatprep.subr.mxu0 0.0
  %1165 = vmatpush1.msra.mxu0 %v31
  %1166 = vmatprep.subr.mxu0 0.0
  %1167 = vmatpush1.msra.mxu0 %v34
  %1168 = vmatprep.subr.mxu0 0.0
  %1169 = vmatpush1.msra.mxu0 %v37
  %1170 = vmatprep.subr.mxu0 0.0
  %1171 = vmatpush1.msra.mxu0 %v40
  %1172 = vmatprep.subr.mxu0 0.0
  %1173 = vmatpush1.msra.mxu0 %v43
  %1174 = vmatprep.subr.mxu0 0.0
  %1175 = vmatpush1.msra.mxu0 %v46
  %1176 = vmatprep.subr.mxu0 0.0
  %1177 = vmatpush1.msra.mxu0 %v49
  %1178 = vmatprep.subr.mxu0 0.0
  %1179 = vmatpush1.msra.mxu0 %v52
  %1180 = vmatprep.subr.mxu0 0.0
  %1181 = vmatpush1.msra.mxu0 %v55
  %1182 = vmatprep.subr.mxu0 0.0
  %1183 = vmatpush1.msra.mxu0 %v58
  %1184 = vmatprep.subr.mxu0 0.0
  %1185 = vmatpush1.msra.mxu0 %v61
  %1186 = vmatprep.subr.mxu0 0.0
  %1187 = vmatpush1.msra.mxu0 %v64
  %1188 = vmatprep.subr.mxu0 0.0
  %1189 = vmatpush1.msra.mxu0 %v67
  %1190 = vmatprep.subr.mxu0 0.0
  %1191 = vmatpush1.msra.mxu0 %v70
  %1192 = vmatprep.subr.mxu0 0.0
  %1193 = vmatpush1.msra.mxu0 0.0
  %1194 = vmatprep.subr.mxu0 0.0
  %1195 = vmatpush1.msra.mxu0 0.0
  %1196 = vmatprep.subr.mxu0 0.0
  %1197 = vmatpush1.msra.mxu0 0.0
  %1198 = vmatprep.subr.mxu0 0.0
  %1199 = vmatpush1.msra.mxu0 0.0
  %1200 = vmatprep.subr.mxu0 0.0
  %1201 = vmatpush1.msra.mxu0 0.0
  %1202 = vmatprep.subr.mxu0 0.0
  %1203 = vmatpush1.msra.mxu0 0.0
  %1204 = vmatprep.subr.mxu0 0.0
  %1205 = vmatpush1.msra.mxu0 0.0
  %1206 = vmatprep.subr.mxu0 0.0
  %1207 = vmatpush1.msra.mxu0 0.0
  %1208 = vmatprep.subr.mxu0 0.0
  %1209 = vmatpush1.msra.mxu0 0.0
  %1210 = vmatprep.subr.mxu0 0.0
  %1211 = vmatpush1.msra.mxu0 0.0
  %1212 = vmatprep.subr.mxu0 0.0
  %1213 = vmatpush1.msra.mxu0 0.0
  %1214 = vmatprep.subr.mxu0 0.0
  %1215 = vmatpush1.msra.mxu0 0.0
  %1216 = vmatprep.subr.mxu0 0.0
  %1217 = vmatpush1.msra.mxu0 0.0
  %1218 = vmatprep.subr.mxu0 0.0
  %1219 = vmatpush1.msra.mxu0 0.0
  %1220 = vmatprep.subr.mxu0 0.0
  %1221 = vmatpush1.msra.mxu0 0.0
  %1222 = vmatprep.subr.mxu0 0.0
  %1223 = vmatpush1.msra.mxu0 0.0
  %1224 = vmatprep.mubr.f32.mxu0 0.0
  %1225 = vmatmul.mubr.f32.gmra.mrb[0].mxu0 %v1082
  %v1226 = vpop.f32.mrb[0].mxu0
  %v1227 = vadd.f32 0.0, %v1226
  %v1228 = vpop.f32.mrb[0].mxu0
  %1229 = vdwg.mxu0
  %v1230 = vadd.f32 %v1086, %v1156
  %v1231 = vadd.f32 %v1087, %v1158
  %v1232 = vxor.u32 %v1230, 2147483648
  %v1233 = vxor.u32 %v1231, 2147483648
  %v1234 = vmul.f32 %v1232, 1.442695
  %v1235 = vpow.pop %v1234
  %v1236 = vmul.f32 %v1233, 1.442695
  %v1237 = vpow.pop %v1236
  %v1238 = vadd.f32 %v1235, 1.0
  %v1239 = vadd.f32 %v1237, 1.0
  %v1240 = vrcp.pop %v1238
  %v1241 = vmul.f32 1.0, %v1240
  %v1242 = vrcp.pop %v1239
  %v1243 = vmul.f32 1.0, %v1242
  %v1244 = vadd.f32 %v1227, %v76
  %v1245 = vmul.f32 %v1241, %v1244
  %v1246 = vadd.f32 %v1088, %v1245
  %v1247 = vtanh.pop %v1246
  %v1248 = vsub.f32 %v1082, %v1247
  %v1249 = vmul.f32 %v1243, %v1248
  %v1250 = vadd.f32 %v1247, %v1249
  %s1251 = scalar_lea.vmem %s4, 48
  %1252 = vst [vmem:[%s1251] sm:$0xff] %v1250
  %s1253 = scalar_lea.vmem %s0, 168
  %v1254 = vld [vmem:[%s1253] sm:$0xff]
  %v1255 = vld [vmem:[%s1253 + $0x8] sm:$0xff]
  %v1256 = vld [vmem:[%s1253 + $0x10] sm:$0xff]
  %1257 = vmatprep.subr.mxu0 %v24
  %1258 = vmatpush1.msra.mxu0 %v23
  %1259 = vmatprep.subr.mxu0 %v27
  %1260 = vmatpush1.msra.mxu0 %v26
  %1261 = vmatprep.subr.mxu0 %v30
  %1262 = vmatpush1.msra.mxu0 %v29
  %1263 = vmatprep.subr.mxu0 %v33
  %1264 = vmatpush1.msra.mxu0 %v32
  %1265 = vmatprep.subr.mxu0 %v36
  %1266 = vmatpush1.msra.mxu0 %v35
  %1267 = vmatprep.subr.mxu0 %v39
  %1268 = vmatpush1.msra.mxu0 %v38
  %1269 = vmatprep.subr.mxu0 %v42
  %1270 = vmatpush1.msra.mxu0 %v41
  %1271 = vmatprep.subr.mxu0 %v45
  %1272 = vmatpush1.msra.mxu0 %v44
  %1273 = vmatprep.subr.mxu0 %v48
  %1274 = vmatpush1.msra.mxu0 %v47
  %1275 = vmatprep.subr.mxu0 %v51
  %1276 = vmatpush1.msra.mxu0 %v50
  %1277 = vmatprep.subr.mxu0 %v54
  %1278 = vmatpush1.msra.mxu0 %v53
  %1279 = vmatprep.subr.mxu0 %v57
  %1280 = vmatpush1.msra.mxu0 %v56
  %1281 = vmatprep.subr.mxu0 %v60
  %1282 = vmatpush1.msra.mxu0 %v59
  %1283 = vmatprep.subr.mxu0 %v63
  %1284 = vmatpush1.msra.mxu0 %v62
  %1285 = vmatprep.subr.mxu0 %v66
  %1286 = vmatpush1.msra.mxu0 %v65
  %1287 = vmatprep.subr.mxu0 %v69
  %1288 = vmatpush1.msra.mxu0 %v68
  %1289 = vmatprep.subr.mxu0 0.0
  %1290 = vmatpush1.msra.mxu0 0.0
  %1291 = vmatprep.subr.mxu0 0.0
  %1292 = vmatpush1.msra.mxu0 0.0
  %1293 = vmatprep.subr.mxu0 0.0
  %1294 = vmatpush1.msra.mxu0 0.0
  %1295 = vmatprep.subr.mxu0 0.0
  %1296 = vmatpush1.msra.mxu0 0.0
  %1297 = vmatprep.subr.mxu0 0.0
  %1298 = vmatpush1.msra.mxu0 0.0
  %1299 = vmatprep.subr.mxu0 0.0
  %1300 = vmatpush1.msra.mxu0 0.0
  %1301 = vmatprep.subr.mxu0 0.0
  %1302 = vmatpush1.msra.mxu0 0.0
  %1303 = vmatprep.subr.mxu0 0.0
  %1304 = vmatpush1.msra.mxu0 0.0
  %1305 = vmatprep.subr.mxu0 0.0
  %1306 = vmatpush1.msra.mxu0 0.0
  %1307 = vmatprep.subr.mxu0 0.0
  %1308 = vmatpush1.msra.mxu0 0.0
  %1309 = vmatprep.subr.mxu0 0.0
  %1310 = vmatpush1.msra.mxu0 0.0
  %1311 = vmatprep.subr.mxu0 0.0
  %1312 = vmatpush1.msra.mxu0 0.0
  %1313 = vmatprep.subr.mxu0 0.0
  %1314 = vmatpush1.msra.mxu0 0.0
  %1315 = vmatprep.subr.mxu0 0.0
  %1316 = vmatpush1.msra.mxu0 0.0
  %1317 = vmatprep.subr.mxu0 0.0
  %1318 = vmatpush1.msra.mxu0 0.0
  %1319 = vmatprep.subr.mxu0 0.0
  %1320 = vmatpush1.msra.mxu0 0.0
  %1321 = vmatprep.mubr.f32.mxu0 0.0
  %1322 = vmatmul.mubr.f32.gmra.mrb[0].mxu0 %v1250
  %v1323 = vpop.f32.mrb[0].mxu0
  %v1324 = vadd.f32 0.0, %v1323
  %v1325 = vpop.f32.mrb[0].mxu0
  %v1326 = vadd.f32 0.0, %v1325
  %1327 = vdwg.mxu0
  %1328 = vmatprep.subr.mxu0 0.0
  %1329 = vmatpush1.msra.mxu0 %v25
  %1330 = vmatprep.subr.mxu0 0.0
  %1331 = vmatpush1.msra.mxu0 %v28
  %1332 = vmatprep.subr.mxu0 0.0
  %1333 = vmatpush1.msra.mxu0 %v31
  %1334 = vmatprep.subr.mxu0 0.0
  %1335 = vmatpush1.msra.mxu0 %v34
  %1336 = vmatprep.subr.mxu0 0.0
  %1337 = vmatpush1.msra.mxu0 %v37
  %1338 = vmatprep.subr.mxu0 0.0
  %1339 = vmatpush1.msra.mxu0 %v40
  %1340 = vmatprep.subr.mxu0 0.0
  %1341 = vmatpush1.msra.mxu0 %v43
  %1342 = vmatprep.subr.mxu0 0.0
  %1343 = vmatpush1.msra.mxu0 %v46
  %1344 = vmatprep.subr.mxu0 0.0
  %1345 = vmatpush1.msra.mxu0 %v49
  %1346 = vmatprep.subr.mxu0 0.0
  %1347 = vmatpush1.msra.mxu0 %v52
  %1348 = vmatprep.subr.mxu0 0.0
  %1349 = vmatpush1.msra.mxu0 %v55
  %1350 = vmatprep.subr.mxu0 0.0
  %1351 = vmatpush1.msra.mxu0 %v58
  %1352 = vmatprep.subr.mxu0 0.0
  %1353 = vmatpush1.msra.mxu0 %v61
  %1354 = vmatprep.subr.mxu0 0.0
  %1355 = vmatpush1.msra.mxu0 %v64
  %1356 = vmatprep.subr.mxu0 0.0
  %1357 = vmatpush1.msra.mxu0 %v67
  %1358 = vmatprep.subr.mxu0 0.0
  %1359 = vmatpush1.msra.mxu0 %v70
  %1360 = vmatprep.subr.mxu0 0.0
  %1361 = vmatpush1.msra.mxu0 0.0
  %1362 = vmatprep.subr.mxu0 0.0
  %1363 = vmatpush1.msra.mxu0 0.0
  %1364 = vmatprep.subr.mxu0 0.0
  %1365 = vmatpush1.msra.mxu0 0.0
  %1366 = vmatprep.subr.mxu0 0.0
  %1367 = vmatpush1.msra.mxu0 0.0
  %1368 = vmatprep.subr.mxu0 0.0
  %1369 = vmatpush1.msra.mxu0 0.0
  %1370 = vmatprep.subr.mxu0 0.0
  %1371 = vmatpush1.msra.mxu0 0.0
  %1372 = vmatprep.subr.mxu0 0.0
  %1373 = vmatpush1.msra.mxu0 0.0
  %1374 = vmatprep.subr.mxu0 0.0
  %1375 = vmatpush1.msra.mxu0 0.0
  %1376 = vmatprep.subr.mxu0 0.0
  %1377 = vmatpush1.msra.mxu0 0.0
  %1378 = vmatprep.subr.mxu0 0.0
  %1379 = vmatpush1.msra.mxu0 0.0
  %1380 = vmatprep.subr.mxu0 0.0
  %1381 = vmatpush1.msra.mxu0 0.0
  %1382 = vmatprep.subr.mxu0 0.0
  %1383 = vmatpush1.msra.mxu0 0.0
  %1384 = vmatprep.subr.mxu0 0.0
  %1385 = vmatpush1.msra.mxu0 0.0
  %1386 = vmatprep.subr.mxu0 0.0
  %1387 = vmatpush1.msra.mxu0 0.0
  %1388 = vmatprep.subr.mxu0 0.0
  %1389 = vmatpush1.msra.mxu0 0.0
  %1390 = vmatprep.subr.mxu0 0.0
  %1391 = vmatpush1.msra.mxu0 0.0
  %1392 = vmatprep.mubr.f32.mxu0 0.0
  %1393 = vmatmul.mubr.f32.gmra.mrb[0].mxu0 %v1250
  %v1394 = vpop.f32.mrb[0].mxu0
  %v1395 = vadd.f32 0.0, %v1394
  %v1396 = vpop.f32.mrb[0].mxu0
  %1397 = vdwg.mxu0
  %v1398 = vadd.f32 %v1254, %v1324
  %v1399 = vadd.f32 %v1255, %v1326
  %v1400 = vxor.u32 %v1398, 2147483648
  %v1401 = vxor.u32 %v1399, 2147483648
  %v1402 = vmul.f32 %v1400, 1.442695
  %v1403 = vpow.pop %v1402
  %v1404 = vmul.f32 %v1401, 1.442695
  %v1405 = vpow.pop %v1404
  %v1406 = vadd.f32 %v1403, 1.0
  %v1407 = vadd.f32 %v1405, 1.0
  %v1408 = vrcp.pop %v1406
  %v1409 = vmul.f32 1.0, %v1408
  %v1410 = vrcp.pop %v1407
  %v1411 = vmul.f32 1.0, %v1410
  %v1412 = vadd.f32 %v1395, %v76
  %v1413 = vmul.f32 %v1409, %v1412
  %v1414 = vadd.f32 %v1256, %v1413
  %v1415 = vtanh.pop %v1414
  %v1416 = vsub.f32 %v1250, %v1415
  %v1417 = vmul.f32 %v1411, %v1416
  %v1418 = vadd.f32 %v1415, %v1417
  %s1419 = scalar_lea.vmem %s4, 56
  %1420 = vst [vmem:[%s1419] sm:$0xff] %v1418
  %1421 = vst [vmem:[#allocation2] sm:$0xff] %v1418
  // Predicated region
  $region22: #{gru_networks_forward.5} parent=0 // pred_check
    _
  $region23: #{gru_networks_forward.5} parent=0 // pred_check_branch
    %1423 = sbr.rel (0) target = $region25
  $region24: #{gru_networks_forward.5} parent=0 // pred_region
    _
  $region25: #{gru_networks_forward.5} parent=0 // pred_fallthru
    _
  // Predicated region
  $region26: #{gru_networks_forward.5} parent=0 // pred_check
    _
  $region27: #{gru_networks_forward.5} parent=0 // pred_check_branch
    %1425 = sbr.rel (0) target = $region29
  $region28: #{gru_networks_forward.5} parent=0 // pred_region
    _
  $region29: #{gru_networks_forward.5} parent=0 // pred_fallthru
    _

</llo_original>
